<compile_context>
chip_gen: v5e
topology: v5e:2x2
jax: 0.10.0
libtpu: 0.0.40
codegen_flags: <defaults>
</compile_context>

<pallas_src>
import math

import jax
import jax.numpy as jnp
import numpy as np
from jax import lax
from jax.experimental import pallas as pl
from jax.experimental.pallas import tpu as pltpu


# ------------------------- fused LSTM-stack + FC kernel -------------------------
def _make_fused_kernel(num_layers, T, Bp, H):
    """Builds the kernel body.  Ref order:
       inputs : x, (w_ih, w_hh, bias) * L, h0, c0, w_fc, b_fc
       outputs: pred, h_n, c_n
       scratch: gx (T*Bp, 4H), y (T*Bp, H)
    """

    def kernel(*refs):
        idx = 0
        x_ref = refs[idx]; idx += 1
        w_ih, w_hh, b = [], [], []
        for _ in range(num_layers):
            w_ih.append(refs[idx]); w_hh.append(refs[idx + 1]); b.append(refs[idx + 2])
            idx += 3
        h0_ref, c0_ref, wfc_ref, bfc_ref = refs[idx:idx + 4]; idx += 4
        pred_ref, hN_ref, cN_ref = refs[idx:idx + 3]; idx += 3
        gx_ref, y_ref = refs[idx:idx + 2]

        for l in range(num_layers):               # static unroll over layers
            x_in = x_ref[...] if l == 0 else y_ref[...]
            # Hoisted, time-invariant input projection for the whole sequence
            # (bias folded in): one big matmul instead of T tiny ones.
            gx_ref[...] = (jnp.dot(x_in, w_ih[l][...],
                                   preferred_element_type=jnp.float32)
                           + b[l][...])
            whh = w_hh[l][...]                    # load resident weight once
            h0 = h0_ref[l]                        # (Bp, H)
            c0 = c0_ref[l]

            def step(t, carry, whh=whh):
                h, c = carry
                row = pl.multiple_of(t * Bp, Bp)
                g = gx_ref[pl.ds(row, Bp), :] + jnp.dot(
                    h, whh, preferred_element_type=jnp.float32)   # (Bp, 4H)
                sig = jax.nn.sigmoid(g)           # full-vreg EUP op
                th = jnp.tanh(g)                  # full-vreg EUP op
                i_g = sig[:, 0 * H:1 * H]         # PyTorch gate order i,f,g,o
                f_g = sig[:, 1 * H:2 * H]
                g_g = th[:, 2 * H:3 * H]
                o_g = sig[:, 3 * H:4 * H]
                c_new = f_g * c + i_g * g_g
                h_new = o_g * jnp.tanh(c_new)
                y_ref[pl.ds(row, Bp), :] = h_new  # stays in VMEM scratch
                return (h_new, c_new)

            h_fin, c_fin = lax.fori_loop(0, T, step, (h0, c0), unroll=True)
            hN_ref[l] = h_fin                     # final state written once
            cN_ref[l] = c_fin

        # FC head fused into the same kernel: (T*Bp, H) @ (H, V) + b, lane-dense.
        pred_ref[...] = (jnp.dot(y_ref[...], wfc_ref[...],
                                 preferred_element_type=jnp.float32)
                         + bfc_ref[...])

    return kernel


# --------------------------------- model glue ---------------------------------
def model_forward(params, src, hidden):
    """Equivalent of LSTM.forward(src, hidden).

    src: int32 (B, T) token ids; hidden: (h0, c0) each (L, B, H).
    Returns (prediction (B, T, V), (h_n (L,B,H), c_n (L,B,H))).
    """
    h0_all, c0_all = hidden
    L, B, H = h0_all.shape
    # embedding lookup + dropout(identity) -- glue, not the hot path
    emb = jnp.take(params["embedding"], src, axis=0)            # (B, T, E)
    T, E = emb.shape[1], emb.shape[2]
    x_tm = jnp.transpose(emb, (1, 0, 2)).astype(jnp.float32)    # (T, B, E)

    # pad batch to a multiple of 8 sublanes (padded rows are independent junk,
    # sliced off at the end).
    Bp = ((B + 7) // 8) * 8
    pad_b = Bp - B
    x_p = jnp.pad(x_tm, ((0, 0), (0, pad_b), (0, 0))).reshape(T * Bp, E)
    h0_p = jnp.pad(h0_all, ((0, 0), (0, pad_b), (0, 0)))
    c0_p = jnp.pad(c0_all, ((0, 0), (0, pad_b), (0, 0)))

    V = params["w_fc_t"].shape[-1]
    H4 = 4 * H

    inputs = [x_p]
    in_specs = [pl.BlockSpec((T * Bp, E), lambda i: (0, 0))]
    for l in range(L):
        w_ih_l = params["w_ih"][l]
        w_hh_l = params["w_hh"][l]
        bias_l = params["bias"][l]
        inputs += [w_ih_l, w_hh_l, bias_l]
        in_specs += [
            pl.BlockSpec(w_ih_l.shape, lambda i: (0, 0)),
            pl.BlockSpec(w_hh_l.shape, lambda i: (0, 0)),
            pl.BlockSpec(bias_l.shape, lambda i: (0, 0)),
        ]
    inputs += [h0_p, c0_p, params["w_fc_t"], params["b_fc"]]
    in_specs += [
        pl.BlockSpec((L, Bp, H), lambda i: (0, 0, 0)),
        pl.BlockSpec((L, Bp, H), lambda i: (0, 0, 0)),
        pl.BlockSpec((H, V), lambda i: (0, 0)),
        pl.BlockSpec((1, V), lambda i: (0, 0)),
    ]

    out_shape = (
        jax.ShapeDtypeStruct((T * Bp, V), jnp.float32),   # logits (time-major)
        jax.ShapeDtypeStruct((L, Bp, H), jnp.float32),    # h_n
        jax.ShapeDtypeStruct((L, Bp, H), jnp.float32),    # c_n
    )
    out_specs = (
        pl.BlockSpec((T * Bp, V), lambda i: (0, 0)),
        pl.BlockSpec((L, Bp, H), lambda i: (0, 0, 0)),
        pl.BlockSpec((L, Bp, H), lambda i: (0, 0, 0)),
    )

    pred_p, hN_p, cN_p = pl.pallas_call(
        _make_fused_kernel(L, T, Bp, H),
        out_shape=out_shape,
        grid=(1,),
        in_specs=in_specs,
        out_specs=out_specs,
        scratch_shapes=[
            pltpu.VMEM((T * Bp, H4), jnp.float32),   # hoisted input gates
            pltpu.VMEM((T * Bp, H), jnp.float32),    # per-layer outputs
        ],
        compiler_params=pltpu.CompilerParams(
            dimension_semantics=("arbitrary",)),
    )(*inputs)

    pred = pred_p.reshape(T, Bp, V)[:, :B, :].transpose(1, 0, 2)  # (B, T, V)
    return pred, (hN_p[:, :B, :], cN_p[:, :B, :])


# ------------------------------ pure-JAX reference ----------------------------
def reference_forward(params, src, hidden):
    h_all, c_all = hidden
    x = jnp.take(params["embedding"], src, axis=0)             # (B, T, E)
    B, T, _ = x.shape
    h_fin, c_fin = [], []
    for l in range(len(params["w_ih"])):
        h, c = h_all[l], c_all[l]
        H = h.shape[-1]
        ys = []
        for t in range(T):
            gates = (x[:, t] @ params["w_ih"][l] + h @ params["w_hh"][l]
                     + params["bias"][l])
            i = jax.nn.sigmoid(gates[:, :H])
            f = jax.nn.sigmoid(gates[:, H:2 * H])
            g = jnp.tanh(gates[:, 2 * H:3 * H])
            o = jax.nn.sigmoid(gates[:, 3 * H:])
            c = f * c + i * g
            h = o * jnp.tanh(c)
            ys.append(h)
        x = jnp.stack(ys, axis=1)
        h_fin.append(h)
        c_fin.append(c)
    pred = x @ params["w_fc_t"] + params["b_fc"]
    return pred, (jnp.stack(h_fin), jnp.stack(c_fin))


# ----------------------------------- main --------------------------------------
if __name__ == "__main__":
    vocab_size, embedding_dim, hidden_dim, num_layers = 256, 32, 32, 2
    B, T = 2, 8
    # tie_weights=False; dropout_rate irrelevant at inference (identity).

    r_embed = 0.1
    r_other = 1.0 / math.sqrt(hidden_dim)
    key = jax.random.PRNGKey(0)
    keys = jax.random.split(key, 3 + 4 * num_layers)

    embedding = jax.random.uniform(keys[0], (vocab_size, embedding_dim),
                                   jnp.float32, -r_embed, r_embed)
    w_fc = jax.random.uniform(keys[1], (vocab_size, hidden_dim),
                              jnp.float32, -r_other, r_other)
    b_fc = jnp.zeros((1, vocab_size), jnp.float32)   # fc.bias.zero_()

    w_ih, w_hh, bias = [], [], []
    for l in range(num_layers):
        in_dim = embedding_dim if l == 0 else hidden_dim
        k = keys[3 + 4 * l: 3 + 4 * l + 4]
        w_ih.append(jax.random.uniform(k[0], (in_dim, 4 * hidden_dim),
                                       jnp.float32, -r_other, r_other))
        w_hh.append(jax.random.uniform(k[1], (hidden_dim, 4 * hidden_dim),
                                       jnp.float32, -r_other, r_other))
        b_ih = jax.random.uniform(k[2], (4 * hidden_dim,), jnp.float32,
                                  -r_other, r_other)
        b_hh = jax.random.uniform(k[3], (4 * hidden_dim,), jnp.float32,
                                  -r_other, r_other)
        bias.append((b_ih + b_hh).reshape(1, 4 * hidden_dim))

    params = dict(embedding=embedding, w_fc_t=w_fc.T, b_fc=b_fc,
                  w_ih=w_ih, w_hh=w_hh, bias=bias)

    src = jax.random.randint(jax.random.PRNGKey(42), (B, T), 0, vocab_size,
                             dtype=jnp.int32)
    hidden = (jnp.zeros((num_layers, B, hidden_dim), jnp.float32),
              jnp.zeros((num_layers, B, hidden_dim), jnp.float32))

    pred, (h_n, c_n) = model_forward(params, src, hidden)
    jax.block_until_ready(pred)

    pred_ref, (h_ref, c_ref) = reference_forward(params, src, hidden)
    np.testing.assert_allclose(np.asarray(pred), np.asarray(pred_ref),
                               rtol=1e-4, atol=1e-4)
    np.testing.assert_allclose(np.asarray(h_n), np.asarray(h_ref),
                               rtol=1e-4, atol=1e-4)
    np.testing.assert_allclose(np.asarray(c_n), np.asarray(c_ref),
                               rtol=1e-4, atol=1e-4)

    assert pred.shape == (B, T, vocab_size)
    assert h_n.shape == (num_layers, B, hidden_dim)
    print("KERNEL_OK")
</pallas_src>

<mosaic_0001>
module attributes {stable_mosaic.version = 11 : i64} {
  func.func @kernel(%arg0: i32, %arg1: memref<64x32xf32, #tpu.memory_space<vmem>>, %arg2: memref<32x128xf32, #tpu.memory_space<vmem>>, %arg3: memref<32x128xf32, #tpu.memory_space<vmem>>, %arg4: memref<1x128xf32, #tpu.memory_space<vmem>>, %arg5: memref<32x128xf32, #tpu.memory_space<vmem>>, %arg6: memref<32x128xf32, #tpu.memory_space<vmem>>, %arg7: memref<1x128xf32, #tpu.memory_space<vmem>>, %arg8: memref<2x8x32xf32, #tpu.memory_space<vmem>>, %arg9: memref<2x8x32xf32, #tpu.memory_space<vmem>>, %arg10: memref<32x256xf32, #tpu.memory_space<vmem>>, %arg11: memref<1x256xf32, #tpu.memory_space<vmem>>, %arg12: memref<64x256xf32, #tpu.memory_space<vmem>>, %arg13: memref<2x8x32xf32, #tpu.memory_space<vmem>>, %arg14: memref<2x8x32xf32, #tpu.memory_space<vmem>>, %arg15: memref<64x128xf32, #tpu.memory_space<vmem>>, %arg16: memref<64x32xf32, #tpu.memory_space<vmem>>) attributes {dimension_semantics = [#tpu.dimension_semantics<arbitrary>], iteration_bounds = array<i64: 1>, scalar_prefetch = 0 : i64, scratch_operands = 2 : i64, tpu.core_type = #tpu.core_type<tc>, window_params = [{pipeline_mode = #tpu.pipeline_mode<synchronous>, transform_indices = @transform_0, window_bounds = array<i64: 64, 32>}, {pipeline_mode = #tpu.pipeline_mode<synchronous>, transform_indices = @transform_1, window_bounds = array<i64: 32, 128>}, {pipeline_mode = #tpu.pipeline_mode<synchronous>, transform_indices = @transform_2, window_bounds = array<i64: 32, 128>}, {pipeline_mode = #tpu.pipeline_mode<synchronous>, transform_indices = @transform_3, window_bounds = array<i64: 1, 128>}, {pipeline_mode = #tpu.pipeline_mode<synchronous>, transform_indices = @transform_4, window_bounds = array<i64: 32, 128>}, {pipeline_mode = #tpu.pipeline_mode<synchronous>, transform_indices = @transform_5, window_bounds = array<i64: 32, 128>}, {pipeline_mode = #tpu.pipeline_mode<synchronous>, transform_indices = @transform_6, window_bounds = array<i64: 1, 128>}, {pipeline_mode = #tpu.pipeline_mode<synchronous>, transform_indices = @transform_7, window_bounds = array<i64: 2, 8, 32>}, {pipeline_mode = #tpu.pipeline_mode<synchronous>, transform_indices = @transform_8, window_bounds = array<i64: 2, 8, 32>}, {pipeline_mode = #tpu.pipeline_mode<synchronous>, transform_indices = @transform_9, window_bounds = array<i64: 32, 256>}, {pipeline_mode = #tpu.pipeline_mode<synchronous>, transform_indices = @transform_10, window_bounds = array<i64: 1, 256>}, {pipeline_mode = #tpu.pipeline_mode<synchronous>, transform_indices = @transform_11, window_bounds = array<i64: 64, 256>}, {pipeline_mode = #tpu.pipeline_mode<synchronous>, transform_indices = @transform_12, window_bounds = array<i64: 2, 8, 32>}, {pipeline_mode = #tpu.pipeline_mode<synchronous>, transform_indices = @transform_13, window_bounds = array<i64: 2, 8, 32>}]} {
    %c0 = arith.constant 0 : index
    %c0_0 = arith.constant 0 : index
    %0 = vector.load %arg1[%c0, %c0_0] : memref<64x32xf32, #tpu.memory_space<vmem>>, vector<64x32xf32>
    %c0_1 = arith.constant 0 : index
    %c0_2 = arith.constant 0 : index
    %1 = vector.load %arg2[%c0_1, %c0_2] : memref<32x128xf32, #tpu.memory_space<vmem>>, vector<32x128xf32>
    %cst = arith.constant dense<0.000000e+00> : vector<64x128xf32>
    %2 = tpu.matmul %0, %1, %cst {dimension_numbers = #tpu.dot_dimension_numbers<[1], [0], [0], [1], [0, 0, 1, 1], [], []>} : vector<64x32xf32>, vector<32x128xf32>, vector<64x128xf32> -> vector<64x128xf32>
    %c0_3 = arith.constant 0 : index
    %c0_4 = arith.constant 0 : index
    %3 = vector.load %arg4[%c0_3, %c0_4] : memref<1x128xf32, #tpu.memory_space<vmem>>, vector<1x128xf32>
    %4 = vector.broadcast %3 : vector<1x128xf32> to vector<64x128xf32>
    %5 = arith.addf %2, %4 : vector<64x128xf32>
    %c0_5 = arith.constant 0 : index
    %c0_6 = arith.constant 0 : index
    %6 = vector.load %arg15[%c0_5, %c0_6] : memref<64x128xf32, #tpu.memory_space<vmem>>, vector<64x128xf32>
    tpu.vector_store %arg15[%c0_5, %c0_6], %5 {strides = array<i32>} : memref<64x128xf32, #tpu.memory_space<vmem>>, vector<64x128xf32>,
    %c0_7 = arith.constant 0 : index
    %c0_8 = arith.constant 0 : index
    %7 = vector.load %arg3[%c0_7, %c0_8] : memref<32x128xf32, #tpu.memory_space<vmem>>, vector<32x128xf32>
    %c0_9 = arith.constant 0 : index
    %c0_10 = arith.constant 0 : index
    %c0_11 = arith.constant 0 : index
    %8 = vector.load %arg8[%c0_9, %c0_10, %c0_11] : memref<2x8x32xf32, #tpu.memory_space<vmem>>, vector<1x8x32xf32>
    %9 = vector.shape_cast %8 : vector<1x8x32xf32> to vector<8x32xf32>
    %c0_12 = arith.constant 0 : index
    %c0_13 = arith.constant 0 : index
    %c0_14 = arith.constant 0 : index
    %10 = vector.load %arg9[%c0_12, %c0_13, %c0_14] : memref<2x8x32xf32, #tpu.memory_space<vmem>>, vector<1x8x32xf32>
    %11 = vector.shape_cast %10 : vector<1x8x32xf32> to vector<8x32xf32>
    %c0_i32 = arith.constant 0 : i32
    %c8_i32 = arith.constant 8 : i32
    %12 = arith.muli %c0_i32, %c8_i32 : i32
    %13 = tpu.assume_multiple %12, 8 : i32
    %14 = arith.index_cast %13 : i32 to index
    %c0_15 = arith.constant 0 : index
    %15 = vector.load %arg15[%14, %c0_15] : memref<64x128xf32, #tpu.memory_space<vmem>>, vector<8x128xf32>
    %cst_16 = arith.constant dense<0.000000e+00> : vector<8x128xf32>
    %16 = tpu.matmul %9, %7, %cst_16 {dimension_numbers = #tpu.dot_dimension_numbers<[1], [0], [0], [1], [0, 0, 1, 1], [], []>} : vector<8x32xf32>, vector<32x128xf32>, vector<8x128xf32> -> vector<8x128xf32>
    %17 = arith.addf %15, %16 : vector<8x128xf32>
    %18 = arith.negf %17 : vector<8x128xf32>
    %19 = math.exp %18 : vector<8x128xf32>
    %cst_17 = arith.constant 1.000000e+00 : f32
    %20 = vector.broadcast %cst_17 : f32 to vector<8x128xf32>
    %21 = arith.addf %20, %19 : vector<8x128xf32>
    %22 = arith.divf %20, %21 : vector<8x128xf32>
    %23 = math.tanh %17 : vector<8x128xf32>
    %24 = vector.extract_strided_slice %22 {offsets = [0, 0], sizes = [8, 32], strides = [1, 1]} : vector<8x128xf32> to vector<8x32xf32>
    %25 = vector.extract_strided_slice %22 {offsets = [0, 32], sizes = [8, 32], strides = [1, 1]} : vector<8x128xf32> to vector<8x32xf32>
    %26 = vector.extract_strided_slice %23 {offsets = [0, 64], sizes = [8, 32], strides = [1, 1]} : vector<8x128xf32> to vector<8x32xf32>
    %27 = vector.extract_strided_slice %22 {offsets = [0, 96], sizes = [8, 32], strides = [1, 1]} : vector<8x128xf32> to vector<8x32xf32>
    %28 = arith.mulf %25, %11 : vector<8x32xf32>
    %29 = arith.mulf %24, %26 : vector<8x32xf32>
    %30 = arith.addf %28, %29 : vector<8x32xf32>
    %31 = math.tanh %30 : vector<8x32xf32>
    %32 = arith.mulf %27, %31 : vector<8x32xf32>
    %33 = arith.index_cast %13 : i32 to index
    %c0_18 = arith.constant 0 : index
    %34 = vector.load %arg16[%33, %c0_18] : memref<64x32xf32, #tpu.memory_space<vmem>>, vector<8x32xf32>
    tpu.vector_store %arg16[%33, %c0_18], %32 {strides = array<i32>} : memref<64x32xf32, #tpu.memory_space<vmem>>, vector<8x32xf32>,
    %c1_i32 = arith.constant 1 : i32
    %c8_i32_19 = arith.constant 8 : i32
    %35 = arith.muli %c1_i32, %c8_i32_19 : i32
    %36 = tpu.assume_multiple %35, 8 : i32
    %37 = arith.index_cast %36 : i32 to index
    %c0_20 = arith.constant 0 : index
    %38 = vector.load %arg15[%37, %c0_20] : memref<64x128xf32, #tpu.memory_space<vmem>>, vector<8x128xf32>
    %cst_21 = arith.constant dense<0.000000e+00> : vector<8x128xf32>
    %39 = tpu.matmul %32, %7, %cst_21 {dimension_numbers = #tpu.dot_dimension_numbers<[1], [0], [0], [1], [0, 0, 1, 1], [], []>} : vector<8x32xf32>, vector<32x128xf32>, vector<8x128xf32> -> vector<8x128xf32>
    %40 = arith.addf %38, %39 : vector<8x128xf32>
    %41 = arith.negf %40 : vector<8x128xf32>
    %42 = math.exp %41 : vector<8x128xf32>
    %cst_22 = arith.constant 1.000000e+00 : f32
    %43 = vector.broadcast %cst_22 : f32 to vector<8x128xf32>
    %44 = arith.addf %43, %42 : vector<8x128xf32>
    %45 = arith.divf %43, %44 : vector<8x128xf32>
    %46 = math.tanh %40 : vector<8x128xf32>
    %47 = vector.extract_strided_slice %45 {offsets = [0, 0], sizes = [8, 32], strides = [1, 1]} : vector<8x128xf32> to vector<8x32xf32>
    %48 = vector.extract_strided_slice %45 {offsets = [0, 32], sizes = [8, 32], strides = [1, 1]} : vector<8x128xf32> to vector<8x32xf32>
    %49 = vector.extract_strided_slice %46 {offsets = [0, 64], sizes = [8, 32], strides = [1, 1]} : vector<8x128xf32> to vector<8x32xf32>
    %50 = vector.extract_strided_slice %45 {offsets = [0, 96], sizes = [8, 32], strides = [1, 1]} : vector<8x128xf32> to vector<8x32xf32>
    %51 = arith.mulf %48, %30 : vector<8x32xf32>
    %52 = arith.mulf %47, %49 : vector<8x32xf32>
    %53 = arith.addf %51, %52 : vector<8x32xf32>
    %54 = math.tanh %53 : vector<8x32xf32>
    %55 = arith.mulf %50, %54 : vector<8x32xf32>
    %56 = arith.index_cast %36 : i32 to index
    %c0_23 = arith.constant 0 : index
    %57 = vector.load %arg16[%56, %c0_23] : memref<64x32xf32, #tpu.memory_space<vmem>>, vector<8x32xf32>
    tpu.vector_store %arg16[%56, %c0_23], %55 {strides = array<i32>} : memref<64x32xf32, #tpu.memory_space<vmem>>, vector<8x32xf32>,
    %c2_i32 = arith.constant 2 : i32
    %c8_i32_24 = arith.constant 8 : i32
    %58 = arith.muli %c2_i32, %c8_i32_24 : i32
    %59 = tpu.assume_multiple %58, 8 : i32
    %60 = arith.index_cast %59 : i32 to index
    %c0_25 = arith.constant 0 : index
    %61 = vector.load %arg15[%60, %c0_25] : memref<64x128xf32, #tpu.memory_space<vmem>>, vector<8x128xf32>
    %cst_26 = arith.constant dense<0.000000e+00> : vector<8x128xf32>
    %62 = tpu.matmul %55, %7, %cst_26 {dimension_numbers = #tpu.dot_dimension_numbers<[1], [0], [0], [1], [0, 0, 1, 1], [], []>} : vector<8x32xf32>, vector<32x128xf32>, vector<8x128xf32> -> vector<8x128xf32>
    %63 = arith.addf %61, %62 : vector<8x128xf32>
    %64 = arith.negf %63 : vector<8x128xf32>
    %65 = math.exp %64 : vector<8x128xf32>
    %cst_27 = arith.constant 1.000000e+00 : f32
    %66 = vector.broadcast %cst_27 : f32 to vector<8x128xf32>
    %67 = arith.addf %66, %65 : vector<8x128xf32>
    %68 = arith.divf %66, %67 : vector<8x128xf32>
    %69 = math.tanh %63 : vector<8x128xf32>
    %70 = vector.extract_strided_slice %68 {offsets = [0, 0], sizes = [8, 32], strides = [1, 1]} : vector<8x128xf32> to vector<8x32xf32>
    %71 = vector.extract_strided_slice %68 {offsets = [0, 32], sizes = [8, 32], strides = [1, 1]} : vector<8x128xf32> to vector<8x32xf32>
    %72 = vector.extract_strided_slice %69 {offsets = [0, 64], sizes = [8, 32], strides = [1, 1]} : vector<8x128xf32> to vector<8x32xf32>
    %73 = vector.extract_strided_slice %68 {offsets = [0, 96], sizes = [8, 32], strides = [1, 1]} : vector<8x128xf32> to vector<8x32xf32>
    %74 = arith.mulf %71, %53 : vector<8x32xf32>
    %75 = arith.mulf %70, %72 : vector<8x32xf32>
    %76 = arith.addf %74, %75 : vector<8x32xf32>
    %77 = math.tanh %76 : vector<8x32xf32>
    %78 = arith.mulf %73, %77 : vector<8x32xf32>
    %79 = arith.index_cast %59 : i32 to index
    %c0_28 = arith.constant 0 : index
    %80 = vector.load %arg16[%79, %c0_28] : memref<64x32xf32, #tpu.memory_space<vmem>>, vector<8x32xf32>
    tpu.vector_store %arg16[%79, %c0_28], %78 {strides = array<i32>} : memref<64x32xf32, #tpu.memory_space<vmem>>, vector<8x32xf32>,
    %c3_i32 = arith.constant 3 : i32
    %c8_i32_29 = arith.constant 8 : i32
    %81 = arith.muli %c3_i32, %c8_i32_29 : i32
    %82 = tpu.assume_multiple %81, 8 : i32
    %83 = arith.index_cast %82 : i32 to index
    %c0_30 = arith.constant 0 : index
    %84 = vector.load %arg15[%83, %c0_30] : memref<64x128xf32, #tpu.memory_space<vmem>>, vector<8x128xf32>
    %cst_31 = arith.constant dense<0.000000e+00> : vector<8x128xf32>
    %85 = tpu.matmul %78, %7, %cst_31 {dimension_numbers = #tpu.dot_dimension_numbers<[1], [0], [0], [1], [0, 0, 1, 1], [], []>} : vector<8x32xf32>, vector<32x128xf32>, vector<8x128xf32> -> vector<8x128xf32>
    %86 = arith.addf %84, %85 : vector<8x128xf32>
    %87 = arith.negf %86 : vector<8x128xf32>
    %88 = math.exp %87 : vector<8x128xf32>
    %cst_32 = arith.constant 1.000000e+00 : f32
    %89 = vector.broadcast %cst_32 : f32 to vector<8x128xf32>
    %90 = arith.addf %89, %88 : vector<8x128xf32>
    %91 = arith.divf %89, %90 : vector<8x128xf32>
    %92 = math.tanh %86 : vector<8x128xf32>
    %93 = vector.extract_strided_slice %91 {offsets = [0, 0], sizes = [8, 32], strides = [1, 1]} : vector<8x128xf32> to vector<8x32xf32>
    %94 = vector.extract_strided_slice %91 {offsets = [0, 32], sizes = [8, 32], strides = [1, 1]} : vector<8x128xf32> to vector<8x32xf32>
    %95 = vector.extract_strided_slice %92 {offsets = [0, 64], sizes = [8, 32], strides = [1, 1]} : vector<8x128xf32> to vector<8x32xf32>
    %96 = vector.extract_strided_slice %91 {offsets = [0, 96], sizes = [8, 32], strides = [1, 1]} : vector<8x128xf32> to vector<8x32xf32>
    %97 = arith.mulf %94, %76 : vector<8x32xf32>
    %98 = arith.mulf %93, %95 : vector<8x32xf32>
    %99 = arith.addf %97, %98 : vector<8x32xf32>
    %100 = math.tanh %99 : vector<8x32xf32>
    %101 = arith.mulf %96, %100 : vector<8x32xf32>
    %102 = arith.index_cast %82 : i32 to index
    %c0_33 = arith.constant 0 : index
    %103 = vector.load %arg16[%102, %c0_33] : memref<64x32xf32, #tpu.memory_space<vmem>>, vector<8x32xf32>
    tpu.vector_store %arg16[%102, %c0_33], %101 {strides = array<i32>} : memref<64x32xf32, #tpu.memory_space<vmem>>, vector<8x32xf32>,
    %c4_i32 = arith.constant 4 : i32
    %c8_i32_34 = arith.constant 8 : i32
    %104 = arith.muli %c4_i32, %c8_i32_34 : i32
    %105 = tpu.assume_multiple %104, 8 : i32
    %106 = arith.index_cast %105 : i32 to index
    %c0_35 = arith.constant 0 : index
    %107 = vector.load %arg15[%106, %c0_35] : memref<64x128xf32, #tpu.memory_space<vmem>>, vector<8x128xf32>
    %cst_36 = arith.constant dense<0.000000e+00> : vector<8x128xf32>
    %108 = tpu.matmul %101, %7, %cst_36 {dimension_numbers = #tpu.dot_dimension_numbers<[1], [0], [0], [1], [0, 0, 1, 1], [], []>} : vector<8x32xf32>, vector<32x128xf32>, vector<8x128xf32> -> vector<8x128xf32>
    %109 = arith.addf %107, %108 : vector<8x128xf32>
    %110 = arith.negf %109 : vector<8x128xf32>
    %111 = math.exp %110 : vector<8x128xf32>
    %cst_37 = arith.constant 1.000000e+00 : f32
    %112 = vector.broadcast %cst_37 : f32 to vector<8x128xf32>
    %113 = arith.addf %112, %111 : vector<8x128xf32>
    %114 = arith.divf %112, %113 : vector<8x128xf32>
    %115 = math.tanh %109 : vector<8x128xf32>
    %116 = vector.extract_strided_slice %114 {offsets = [0, 0], sizes = [8, 32], strides = [1, 1]} : vector<8x128xf32> to vector<8x32xf32>
    %117 = vector.extract_strided_slice %114 {offsets = [0, 32], sizes = [8, 32], strides = [1, 1]} : vector<8x128xf32> to vector<8x32xf32>
    %118 = vector.extract_strided_slice %115 {offsets = [0, 64], sizes = [8, 32], strides = [1, 1]} : vector<8x128xf32> to vector<8x32xf32>
    %119 = vector.extract_strided_slice %114 {offsets = [0, 96], sizes = [8, 32], strides = [1, 1]} : vector<8x128xf32> to vector<8x32xf32>
    %120 = arith.mulf %117, %99 : vector<8x32xf32>
    %121 = arith.mulf %116, %118 : vector<8x32xf32>
    %122 = arith.addf %120, %121 : vector<8x32xf32>
    %123 = math.tanh %122 : vector<8x32xf32>
    %124 = arith.mulf %119, %123 : vector<8x32xf32>
    %125 = arith.index_cast %105 : i32 to index
    %c0_38 = arith.constant 0 : index
    %126 = vector.load %arg16[%125, %c0_38] : memref<64x32xf32, #tpu.memory_space<vmem>>, vector<8x32xf32>
    tpu.vector_store %arg16[%125, %c0_38], %124 {strides = array<i32>} : memref<64x32xf32, #tpu.memory_space<vmem>>, vector<8x32xf32>,
    %c5_i32 = arith.constant 5 : i32
    %c8_i32_39 = arith.constant 8 : i32
    %127 = arith.muli %c5_i32, %c8_i32_39 : i32
    %128 = tpu.assume_multiple %127, 8 : i32
    %129 = arith.index_cast %128 : i32 to index
    %c0_40 = arith.constant 0 : index
    %130 = vector.load %arg15[%129, %c0_40] : memref<64x128xf32, #tpu.memory_space<vmem>>, vector<8x128xf32>
    %cst_41 = arith.constant dense<0.000000e+00> : vector<8x128xf32>
    %131 = tpu.matmul %124, %7, %cst_41 {dimension_numbers = #tpu.dot_dimension_numbers<[1], [0], [0], [1], [0, 0, 1, 1], [], []>} : vector<8x32xf32>, vector<32x128xf32>, vector<8x128xf32> -> vector<8x128xf32>
    %132 = arith.addf %130, %131 : vector<8x128xf32>
    %133 = arith.negf %132 : vector<8x128xf32>
    %134 = math.exp %133 : vector<8x128xf32>
    %cst_42 = arith.constant 1.000000e+00 : f32
    %135 = vector.broadcast %cst_42 : f32 to vector<8x128xf32>
    %136 = arith.addf %135, %134 : vector<8x128xf32>
    %137 = arith.divf %135, %136 : vector<8x128xf32>
    %138 = math.tanh %132 : vector<8x128xf32>
    %139 = vector.extract_strided_slice %137 {offsets = [0, 0], sizes = [8, 32], strides = [1, 1]} : vector<8x128xf32> to vector<8x32xf32>
    %140 = vector.extract_strided_slice %137 {offsets = [0, 32], sizes = [8, 32], strides = [1, 1]} : vector<8x128xf32> to vector<8x32xf32>
    %141 = vector.extract_strided_slice %138 {offsets = [0, 64], sizes = [8, 32], strides = [1, 1]} : vector<8x128xf32> to vector<8x32xf32>
    %142 = vector.extract_strided_slice %137 {offsets = [0, 96], sizes = [8, 32], strides = [1, 1]} : vector<8x128xf32> to vector<8x32xf32>
    %143 = arith.mulf %140, %122 : vector<8x32xf32>
    %144 = arith.mulf %139, %141 : vector<8x32xf32>
    %145 = arith.addf %143, %144 : vector<8x32xf32>
    %146 = math.tanh %145 : vector<8x32xf32>
    %147 = arith.mulf %142, %146 : vector<8x32xf32>
    %148 = arith.index_cast %128 : i32 to index
    %c0_43 = arith.constant 0 : index
    %149 = vector.load %arg16[%148, %c0_43] : memref<64x32xf32, #tpu.memory_space<vmem>>, vector<8x32xf32>
    tpu.vector_store %arg16[%148, %c0_43], %147 {strides = array<i32>} : memref<64x32xf32, #tpu.memory_space<vmem>>, vector<8x32xf32>,
    %c6_i32 = arith.constant 6 : i32
    %c8_i32_44 = arith.constant 8 : i32
    %150 = arith.muli %c6_i32, %c8_i32_44 : i32
    %151 = tpu.assume_multiple %150, 8 : i32
    %152 = arith.index_cast %151 : i32 to index
    %c0_45 = arith.constant 0 : index
    %153 = vector.load %arg15[%152, %c0_45] : memref<64x128xf32, #tpu.memory_space<vmem>>, vector<8x128xf32>
    %cst_46 = arith.constant dense<0.000000e+00> : vector<8x128xf32>
    %154 = tpu.matmul %147, %7, %cst_46 {dimension_numbers = #tpu.dot_dimension_numbers<[1], [0], [0], [1], [0, 0, 1, 1], [], []>} : vector<8x32xf32>, vector<32x128xf32>, vector<8x128xf32> -> vector<8x128xf32>
    %155 = arith.addf %153, %154 : vector<8x128xf32>
    %156 = arith.negf %155 : vector<8x128xf32>
    %157 = math.exp %156 : vector<8x128xf32>
    %cst_47 = arith.constant 1.000000e+00 : f32
    %158 = vector.broadcast %cst_47 : f32 to vector<8x128xf32>
    %159 = arith.addf %158, %157 : vector<8x128xf32>
    %160 = arith.divf %158, %159 : vector<8x128xf32>
    %161 = math.tanh %155 : vector<8x128xf32>
    %162 = vector.extract_strided_slice %160 {offsets = [0, 0], sizes = [8, 32], strides = [1, 1]} : vector<8x128xf32> to vector<8x32xf32>
    %163 = vector.extract_strided_slice %160 {offsets = [0, 32], sizes = [8, 32], strides = [1, 1]} : vector<8x128xf32> to vector<8x32xf32>
    %164 = vector.extract_strided_slice %161 {offsets = [0, 64], sizes = [8, 32], strides = [1, 1]} : vector<8x128xf32> to vector<8x32xf32>
    %165 = vector.extract_strided_slice %160 {offsets = [0, 96], sizes = [8, 32], strides = [1, 1]} : vector<8x128xf32> to vector<8x32xf32>
    %166 = arith.mulf %163, %145 : vector<8x32xf32>
    %167 = arith.mulf %162, %164 : vector<8x32xf32>
    %168 = arith.addf %166, %167 : vector<8x32xf32>
    %169 = math.tanh %168 : vector<8x32xf32>
    %170 = arith.mulf %165, %169 : vector<8x32xf32>
    %171 = arith.index_cast %151 : i32 to index
    %c0_48 = arith.constant 0 : index
    %172 = vector.load %arg16[%171, %c0_48] : memref<64x32xf32, #tpu.memory_space<vmem>>, vector<8x32xf32>
    tpu.vector_store %arg16[%171, %c0_48], %170 {strides = array<i32>} : memref<64x32xf32, #tpu.memory_space<vmem>>, vector<8x32xf32>,
    %c7_i32 = arith.constant 7 : i32
    %c8_i32_49 = arith.constant 8 : i32
    %173 = arith.muli %c7_i32, %c8_i32_49 : i32
    %174 = tpu.assume_multiple %173, 8 : i32
    %175 = arith.index_cast %174 : i32 to index
    %c0_50 = arith.constant 0 : index
    %176 = vector.load %arg15[%175, %c0_50] : memref<64x128xf32, #tpu.memory_space<vmem>>, vector<8x128xf32>
    %cst_51 = arith.constant dense<0.000000e+00> : vector<8x128xf32>
    %177 = tpu.matmul %170, %7, %cst_51 {dimension_numbers = #tpu.dot_dimension_numbers<[1], [0], [0], [1], [0, 0, 1, 1], [], []>} : vector<8x32xf32>, vector<32x128xf32>, vector<8x128xf32> -> vector<8x128xf32>
    %178 = arith.addf %176, %177 : vector<8x128xf32>
    %179 = arith.negf %178 : vector<8x128xf32>
    %180 = math.exp %179 : vector<8x128xf32>
    %cst_52 = arith.constant 1.000000e+00 : f32
    %181 = vector.broadcast %cst_52 : f32 to vector<8x128xf32>
    %182 = arith.addf %181, %180 : vector<8x128xf32>
    %183 = arith.divf %181, %182 : vector<8x128xf32>
    %184 = math.tanh %178 : vector<8x128xf32>
    %185 = vector.extract_strided_slice %183 {offsets = [0, 0], sizes = [8, 32], strides = [1, 1]} : vector<8x128xf32> to vector<8x32xf32>
    %186 = vector.extract_strided_slice %183 {offsets = [0, 32], sizes = [8, 32], strides = [1, 1]} : vector<8x128xf32> to vector<8x32xf32>
    %187 = vector.extract_strided_slice %184 {offsets = [0, 64], sizes = [8, 32], strides = [1, 1]} : vector<8x128xf32> to vector<8x32xf32>
    %188 = vector.extract_strided_slice %183 {offsets = [0, 96], sizes = [8, 32], strides = [1, 1]} : vector<8x128xf32> to vector<8x32xf32>
    %189 = arith.mulf %186, %168 : vector<8x32xf32>
    %190 = arith.mulf %185, %187 : vector<8x32xf32>
    %191 = arith.addf %189, %190 : vector<8x32xf32>
    %192 = math.tanh %191 : vector<8x32xf32>
    %193 = arith.mulf %188, %192 : vector<8x32xf32>
    %194 = arith.index_cast %174 : i32 to index
    %c0_53 = arith.constant 0 : index
    %195 = vector.load %arg16[%194, %c0_53] : memref<64x32xf32, #tpu.memory_space<vmem>>, vector<8x32xf32>
    tpu.vector_store %arg16[%194, %c0_53], %193 {strides = array<i32>} : memref<64x32xf32, #tpu.memory_space<vmem>>, vector<8x32xf32>,
    %c8_i32_54 = arith.constant 8 : i32
    %c0_55 = arith.constant 0 : index
    %c0_56 = arith.constant 0 : index
    %c0_57 = arith.constant 0 : index
    %196 = vector.load %arg13[%c0_55, %c0_56, %c0_57] : memref<2x8x32xf32, #tpu.memory_space<vmem>>, vector<1x8x32xf32>
    %197 = vector.shape_cast %196 : vector<1x8x32xf32> to vector<8x32xf32>
    %198 = vector.shape_cast %193 : vector<8x32xf32> to vector<1x8x32xf32>
    tpu.vector_store %arg13[%c0_55, %c0_56, %c0_57], %198 {strides = array<i32>} : memref<2x8x32xf32, #tpu.memory_space<vmem>>, vector<1x8x32xf32>,
    %c0_58 = arith.constant 0 : index
    %c0_59 = arith.constant 0 : index
    %c0_60 = arith.constant 0 : index
    %199 = vector.load %arg14[%c0_58, %c0_59, %c0_60] : memref<2x8x32xf32, #tpu.memory_space<vmem>>, vector<1x8x32xf32>
    %200 = vector.shape_cast %199 : vector<1x8x32xf32> to vector<8x32xf32>
    %201 = vector.shape_cast %191 : vector<8x32xf32> to vector<1x8x32xf32>
    tpu.vector_store %arg14[%c0_58, %c0_59, %c0_60], %201 {strides = array<i32>} : memref<2x8x32xf32, #tpu.memory_space<vmem>>, vector<1x8x32xf32>,
    %c0_61 = arith.constant 0 : index
    %c0_62 = arith.constant 0 : index
    %202 = vector.load %arg16[%c0_61, %c0_62] : memref<64x32xf32, #tpu.memory_space<vmem>>, vector<64x32xf32>
    %c0_63 = arith.constant 0 : index
    %c0_64 = arith.constant 0 : index
    %203 = vector.load %arg5[%c0_63, %c0_64] : memref<32x128xf32, #tpu.memory_space<vmem>>, vector<32x128xf32>
    %cst_65 = arith.constant dense<0.000000e+00> : vector<64x128xf32>
    %204 = tpu.matmul %202, %203, %cst_65 {dimension_numbers = #tpu.dot_dimension_numbers<[1], [0], [0], [1], [0, 0, 1, 1], [], []>} : vector<64x32xf32>, vector<32x128xf32>, vector<64x128xf32> -> vector<64x128xf32>
    %c0_66 = arith.constant 0 : index
    %c0_67 = arith.constant 0 : index
    %205 = vector.load %arg7[%c0_66, %c0_67] : memref<1x128xf32, #tpu.memory_space<vmem>>, vector<1x128xf32>
    %206 = vector.broadcast %205 : vector<1x128xf32> to vector<64x128xf32>
    %207 = arith.addf %204, %206 : vector<64x128xf32>
    %c0_68 = arith.constant 0 : index
    %c0_69 = arith.constant 0 : index
    %208 = vector.load %arg15[%c0_68, %c0_69] : memref<64x128xf32, #tpu.memory_space<vmem>>, vector<64x128xf32>
    tpu.vector_store %arg15[%c0_68, %c0_69], %207 {strides = array<i32>} : memref<64x128xf32, #tpu.memory_space<vmem>>, vector<64x128xf32>,
    %c0_70 = arith.constant 0 : index
    %c0_71 = arith.constant 0 : index
    %209 = vector.load %arg6[%c0_70, %c0_71] : memref<32x128xf32, #tpu.memory_space<vmem>>, vector<32x128xf32>
    %c1 = arith.constant 1 : index
    %c0_72 = arith.constant 0 : index
    %c0_73 = arith.constant 0 : index
    %210 = vector.load %arg8[%c1, %c0_72, %c0_73] : memref<2x8x32xf32, #tpu.memory_space<vmem>>, vector<1x8x32xf32>
    %211 = vector.shape_cast %210 : vector<1x8x32xf32> to vector<8x32xf32>
    %c1_74 = arith.constant 1 : index
    %c0_75 = arith.constant 0 : index
    %c0_76 = arith.constant 0 : index
    %212 = vector.load %arg9[%c1_74, %c0_75, %c0_76] : memref<2x8x32xf32, #tpu.memory_space<vmem>>, vector<1x8x32xf32>
    %213 = vector.shape_cast %212 : vector<1x8x32xf32> to vector<8x32xf32>
    %c0_i32_77 = arith.constant 0 : i32
    %c8_i32_78 = arith.constant 8 : i32
    %214 = arith.muli %c0_i32_77, %c8_i32_78 : i32
    %215 = tpu.assume_multiple %214, 8 : i32
    %216 = arith.index_cast %215 : i32 to index
    %c0_79 = arith.constant 0 : index
    %217 = vector.load %arg15[%216, %c0_79] : memref<64x128xf32, #tpu.memory_space<vmem>>, vector<8x128xf32>
    %cst_80 = arith.constant dense<0.000000e+00> : vector<8x128xf32>
    %218 = tpu.matmul %211, %209, %cst_80 {dimension_numbers = #tpu.dot_dimension_numbers<[1], [0], [0], [1], [0, 0, 1, 1], [], []>} : vector<8x32xf32>, vector<32x128xf32>, vector<8x128xf32> -> vector<8x128xf32>
    %219 = arith.addf %217, %218 : vector<8x128xf32>
    %220 = arith.negf %219 : vector<8x128xf32>
    %221 = math.exp %220 : vector<8x128xf32>
    %cst_81 = arith.constant 1.000000e+00 : f32
    %222 = vector.broadcast %cst_81 : f32 to vector<8x128xf32>
    %223 = arith.addf %222, %221 : vector<8x128xf32>
    %224 = arith.divf %222, %223 : vector<8x128xf32>
    %225 = math.tanh %219 : vector<8x128xf32>
    %226 = vector.extract_strided_slice %224 {offsets = [0, 0], sizes = [8, 32], strides = [1, 1]} : vector<8x128xf32> to vector<8x32xf32>
    %227 = vector.extract_strided_slice %224 {offsets = [0, 32], sizes = [8, 32], strides = [1, 1]} : vector<8x128xf32> to vector<8x32xf32>
    %228 = vector.extract_strided_slice %225 {offsets = [0, 64], sizes = [8, 32], strides = [1, 1]} : vector<8x128xf32> to vector<8x32xf32>
    %229 = vector.extract_strided_slice %224 {offsets = [0, 96], sizes = [8, 32], strides = [1, 1]} : vector<8x128xf32> to vector<8x32xf32>
    %230 = arith.mulf %227, %213 : vector<8x32xf32>
    %231 = arith.mulf %226, %228 : vector<8x32xf32>
    %232 = arith.addf %230, %231 : vector<8x32xf32>
    %233 = math.tanh %232 : vector<8x32xf32>
    %234 = arith.mulf %229, %233 : vector<8x32xf32>
    %235 = arith.index_cast %215 : i32 to index
    %c0_82 = arith.constant 0 : index
    %236 = vector.load %arg16[%235, %c0_82] : memref<64x32xf32, #tpu.memory_space<vmem>>, vector<8x32xf32>
    tpu.vector_store %arg16[%235, %c0_82], %234 {strides = array<i32>} : memref<64x32xf32, #tpu.memory_space<vmem>>, vector<8x32xf32>,
    %c1_i32_83 = arith.constant 1 : i32
    %c8_i32_84 = arith.constant 8 : i32
    %237 = arith.muli %c1_i32_83, %c8_i32_84 : i32
    %238 = tpu.assume_multiple %237, 8 : i32
    %239 = arith.index_cast %238 : i32 to index
    %c0_85 = arith.constant 0 : index
    %240 = vector.load %arg15[%239, %c0_85] : memref<64x128xf32, #tpu.memory_space<vmem>>, vector<8x128xf32>
    %cst_86 = arith.constant dense<0.000000e+00> : vector<8x128xf32>
    %241 = tpu.matmul %234, %209, %cst_86 {dimension_numbers = #tpu.dot_dimension_numbers<[1], [0], [0], [1], [0, 0, 1, 1], [], []>} : vector<8x32xf32>, vector<32x128xf32>, vector<8x128xf32> -> vector<8x128xf32>
    %242 = arith.addf %240, %241 : vector<8x128xf32>
    %243 = arith.negf %242 : vector<8x128xf32>
    %244 = math.exp %243 : vector<8x128xf32>
    %cst_87 = arith.constant 1.000000e+00 : f32
    %245 = vector.broadcast %cst_87 : f32 to vector<8x128xf32>
    %246 = arith.addf %245, %244 : vector<8x128xf32>
    %247 = arith.divf %245, %246 : vector<8x128xf32>
    %248 = math.tanh %242 : vector<8x128xf32>
    %249 = vector.extract_strided_slice %247 {offsets = [0, 0], sizes = [8, 32], strides = [1, 1]} : vector<8x128xf32> to vector<8x32xf32>
    %250 = vector.extract_strided_slice %247 {offsets = [0, 32], sizes = [8, 32], strides = [1, 1]} : vector<8x128xf32> to vector<8x32xf32>
    %251 = vector.extract_strided_slice %248 {offsets = [0, 64], sizes = [8, 32], strides = [1, 1]} : vector<8x128xf32> to vector<8x32xf32>
    %252 = vector.extract_strided_slice %247 {offsets = [0, 96], sizes = [8, 32], strides = [1, 1]} : vector<8x128xf32> to vector<8x32xf32>
    %253 = arith.mulf %250, %232 : vector<8x32xf32>
    %254 = arith.mulf %249, %251 : vector<8x32xf32>
    %255 = arith.addf %253, %254 : vector<8x32xf32>
    %256 = math.tanh %255 : vector<8x32xf32>
    %257 = arith.mulf %252, %256 : vector<8x32xf32>
    %258 = arith.index_cast %238 : i32 to index
    %c0_88 = arith.constant 0 : index
    %259 = vector.load %arg16[%258, %c0_88] : memref<64x32xf32, #tpu.memory_space<vmem>>, vector<8x32xf32>
    tpu.vector_store %arg16[%258, %c0_88], %257 {strides = array<i32>} : memref<64x32xf32, #tpu.memory_space<vmem>>, vector<8x32xf32>,
    %c2_i32_89 = arith.constant 2 : i32
    %c8_i32_90 = arith.constant 8 : i32
    %260 = arith.muli %c2_i32_89, %c8_i32_90 : i32
    %261 = tpu.assume_multiple %260, 8 : i32
    %262 = arith.index_cast %261 : i32 to index
    %c0_91 = arith.constant 0 : index
    %263 = vector.load %arg15[%262, %c0_91] : memref<64x128xf32, #tpu.memory_space<vmem>>, vector<8x128xf32>
    %cst_92 = arith.constant dense<0.000000e+00> : vector<8x128xf32>
    %264 = tpu.matmul %257, %209, %cst_92 {dimension_numbers = #tpu.dot_dimension_numbers<[1], [0], [0], [1], [0, 0, 1, 1], [], []>} : vector<8x32xf32>, vector<32x128xf32>, vector<8x128xf32> -> vector<8x128xf32>
    %265 = arith.addf %263, %264 : vector<8x128xf32>
    %266 = arith.negf %265 : vector<8x128xf32>
    %267 = math.exp %266 : vector<8x128xf32>
    %cst_93 = arith.constant 1.000000e+00 : f32
    %268 = vector.broadcast %cst_93 : f32 to vector<8x128xf32>
    %269 = arith.addf %268, %267 : vector<8x128xf32>
    %270 = arith.divf %268, %269 : vector<8x128xf32>
    %271 = math.tanh %265 : vector<8x128xf32>
    %272 = vector.extract_strided_slice %270 {offsets = [0, 0], sizes = [8, 32], strides = [1, 1]} : vector<8x128xf32> to vector<8x32xf32>
    %273 = vector.extract_strided_slice %270 {offsets = [0, 32], sizes = [8, 32], strides = [1, 1]} : vector<8x128xf32> to vector<8x32xf32>
    %274 = vector.extract_strided_slice %271 {offsets = [0, 64], sizes = [8, 32], strides = [1, 1]} : vector<8x128xf32> to vector<8x32xf32>
    %275 = vector.extract_strided_slice %270 {offsets = [0, 96], sizes = [8, 32], strides = [1, 1]} : vector<8x128xf32> to vector<8x32xf32>
    %276 = arith.mulf %273, %255 : vector<8x32xf32>
    %277 = arith.mulf %272, %274 : vector<8x32xf32>
    %278 = arith.addf %276, %277 : vector<8x32xf32>
    %279 = math.tanh %278 : vector<8x32xf32>
    %280 = arith.mulf %275, %279 : vector<8x32xf32>
    %281 = arith.index_cast %261 : i32 to index
    %c0_94 = arith.constant 0 : index
    %282 = vector.load %arg16[%281, %c0_94] : memref<64x32xf32, #tpu.memory_space<vmem>>, vector<8x32xf32>
    tpu.vector_store %arg16[%281, %c0_94], %280 {strides = array<i32>} : memref<64x32xf32, #tpu.memory_space<vmem>>, vector<8x32xf32>,
    %c3_i32_95 = arith.constant 3 : i32
    %c8_i32_96 = arith.constant 8 : i32
    %283 = arith.muli %c3_i32_95, %c8_i32_96 : i32
    %284 = tpu.assume_multiple %283, 8 : i32
    %285 = arith.index_cast %284 : i32 to index
    %c0_97 = arith.constant 0 : index
    %286 = vector.load %arg15[%285, %c0_97] : memref<64x128xf32, #tpu.memory_space<vmem>>, vector<8x128xf32>
    %cst_98 = arith.constant dense<0.000000e+00> : vector<8x128xf32>
    %287 = tpu.matmul %280, %209, %cst_98 {dimension_numbers = #tpu.dot_dimension_numbers<[1], [0], [0], [1], [0, 0, 1, 1], [], []>} : vector<8x32xf32>, vector<32x128xf32>, vector<8x128xf32> -> vector<8x128xf32>
    %288 = arith.addf %286, %287 : vector<8x128xf32>
    %289 = arith.negf %288 : vector<8x128xf32>
    %290 = math.exp %289 : vector<8x128xf32>
    %cst_99 = arith.constant 1.000000e+00 : f32
    %291 = vector.broadcast %cst_99 : f32 to vector<8x128xf32>
    %292 = arith.addf %291, %290 : vector<8x128xf32>
    %293 = arith.divf %291, %292 : vector<8x128xf32>
    %294 = math.tanh %288 : vector<8x128xf32>
    %295 = vector.extract_strided_slice %293 {offsets = [0, 0], sizes = [8, 32], strides = [1, 1]} : vector<8x128xf32> to vector<8x32xf32>
    %296 = vector.extract_strided_slice %293 {offsets = [0, 32], sizes = [8, 32], strides = [1, 1]} : vector<8x128xf32> to vector<8x32xf32>
    %297 = vector.extract_strided_slice %294 {offsets = [0, 64], sizes = [8, 32], strides = [1, 1]} : vector<8x128xf32> to vector<8x32xf32>
    %298 = vector.extract_strided_slice %293 {offsets = [0, 96], sizes = [8, 32], strides = [1, 1]} : vector<8x128xf32> to vector<8x32xf32>
    %299 = arith.mulf %296, %278 : vector<8x32xf32>
    %300 = arith.mulf %295, %297 : vector<8x32xf32>
    %301 = arith.addf %299, %300 : vector<8x32xf32>
    %302 = math.tanh %301 : vector<8x32xf32>
    %303 = arith.mulf %298, %302 : vector<8x32xf32>
    %304 = arith.index_cast %284 : i32 to index
    %c0_100 = arith.constant 0 : index
    %305 = vector.load %arg16[%304, %c0_100] : memref<64x32xf32, #tpu.memory_space<vmem>>, vector<8x32xf32>
    tpu.vector_store %arg16[%304, %c0_100], %303 {strides = array<i32>} : memref<64x32xf32, #tpu.memory_space<vmem>>, vector<8x32xf32>,
    %c4_i32_101 = arith.constant 4 : i32
    %c8_i32_102 = arith.constant 8 : i32
    %306 = arith.muli %c4_i32_101, %c8_i32_102 : i32
    %307 = tpu.assume_multiple %306, 8 : i32
    %308 = arith.index_cast %307 : i32 to index
    %c0_103 = arith.constant 0 : index
    %309 = vector.load %arg15[%308, %c0_103] : memref<64x128xf32, #tpu.memory_space<vmem>>, vector<8x128xf32>
    %cst_104 = arith.constant dense<0.000000e+00> : vector<8x128xf32>
    %310 = tpu.matmul %303, %209, %cst_104 {dimension_numbers = #tpu.dot_dimension_numbers<[1], [0], [0], [1], [0, 0, 1, 1], [], []>} : vector<8x32xf32>, vector<32x128xf32>, vector<8x128xf32> -> vector<8x128xf32>
    %311 = arith.addf %309, %310 : vector<8x128xf32>
    %312 = arith.negf %311 : vector<8x128xf32>
    %313 = math.exp %312 : vector<8x128xf32>
    %cst_105 = arith.constant 1.000000e+00 : f32
    %314 = vector.broadcast %cst_105 : f32 to vector<8x128xf32>
    %315 = arith.addf %314, %313 : vector<8x128xf32>
    %316 = arith.divf %314, %315 : vector<8x128xf32>
    %317 = math.tanh %311 : vector<8x128xf32>
    %318 = vector.extract_strided_slice %316 {offsets = [0, 0], sizes = [8, 32], strides = [1, 1]} : vector<8x128xf32> to vector<8x32xf32>
    %319 = vector.extract_strided_slice %316 {offsets = [0, 32], sizes = [8, 32], strides = [1, 1]} : vector<8x128xf32> to vector<8x32xf32>
    %320 = vector.extract_strided_slice %317 {offsets = [0, 64], sizes = [8, 32], strides = [1, 1]} : vector<8x128xf32> to vector<8x32xf32>
    %321 = vector.extract_strided_slice %316 {offsets = [0, 96], sizes = [8, 32], strides = [1, 1]} : vector<8x128xf32> to vector<8x32xf32>
    %322 = arith.mulf %319, %301 : vector<8x32xf32>
    %323 = arith.mulf %318, %320 : vector<8x32xf32>
    %324 = arith.addf %322, %323 : vector<8x32xf32>
    %325 = math.tanh %324 : vector<8x32xf32>
    %326 = arith.mulf %321, %325 : vector<8x32xf32>
    %327 = arith.index_cast %307 : i32 to index
    %c0_106 = arith.constant 0 : index
    %328 = vector.load %arg16[%327, %c0_106] : memref<64x32xf32, #tpu.memory_space<vmem>>, vector<8x32xf32>
    tpu.vector_store %arg16[%327, %c0_106], %326 {strides = array<i32>} : memref<64x32xf32, #tpu.memory_space<vmem>>, vector<8x32xf32>,
    %c5_i32_107 = arith.constant 5 : i32
    %c8_i32_108 = arith.constant 8 : i32
    %329 = arith.muli %c5_i32_107, %c8_i32_108 : i32
    %330 = tpu.assume_multiple %329, 8 : i32
    %331 = arith.index_cast %330 : i32 to index
    %c0_109 = arith.constant 0 : index
    %332 = vector.load %arg15[%331, %c0_109] : memref<64x128xf32, #tpu.memory_space<vmem>>, vector<8x128xf32>
    %cst_110 = arith.constant dense<0.000000e+00> : vector<8x128xf32>
    %333 = tpu.matmul %326, %209, %cst_110 {dimension_numbers = #tpu.dot_dimension_numbers<[1], [0], [0], [1], [0, 0, 1, 1], [], []>} : vector<8x32xf32>, vector<32x128xf32>, vector<8x128xf32> -> vector<8x128xf32>
    %334 = arith.addf %332, %333 : vector<8x128xf32>
    %335 = arith.negf %334 : vector<8x128xf32>
    %336 = math.exp %335 : vector<8x128xf32>
    %cst_111 = arith.constant 1.000000e+00 : f32
    %337 = vector.broadcast %cst_111 : f32 to vector<8x128xf32>
    %338 = arith.addf %337, %336 : vector<8x128xf32>
    %339 = arith.divf %337, %338 : vector<8x128xf32>
    %340 = math.tanh %334 : vector<8x128xf32>
    %341 = vector.extract_strided_slice %339 {offsets = [0, 0], sizes = [8, 32], strides = [1, 1]} : vector<8x128xf32> to vector<8x32xf32>
    %342 = vector.extract_strided_slice %339 {offsets = [0, 32], sizes = [8, 32], strides = [1, 1]} : vector<8x128xf32> to vector<8x32xf32>
    %343 = vector.extract_strided_slice %340 {offsets = [0, 64], sizes = [8, 32], strides = [1, 1]} : vector<8x128xf32> to vector<8x32xf32>
    %344 = vector.extract_strided_slice %339 {offsets = [0, 96], sizes = [8, 32], strides = [1, 1]} : vector<8x128xf32> to vector<8x32xf32>
    %345 = arith.mulf %342, %324 : vector<8x32xf32>
    %346 = arith.mulf %341, %343 : vector<8x32xf32>
    %347 = arith.addf %345, %346 : vector<8x32xf32>
    %348 = math.tanh %347 : vector<8x32xf32>
    %349 = arith.mulf %344, %348 : vector<8x32xf32>
    %350 = arith.index_cast %330 : i32 to index
    %c0_112 = arith.constant 0 : index
    %351 = vector.load %arg16[%350, %c0_112] : memref<64x32xf32, #tpu.memory_space<vmem>>, vector<8x32xf32>
    tpu.vector_store %arg16[%350, %c0_112], %349 {strides = array<i32>} : memref<64x32xf32, #tpu.memory_space<vmem>>, vector<8x32xf32>,
    %c6_i32_113 = arith.constant 6 : i32
    %c8_i32_114 = arith.constant 8 : i32
    %352 = arith.muli %c6_i32_113, %c8_i32_114 : i32
    %353 = tpu.assume_multiple %352, 8 : i32
    %354 = arith.index_cast %353 : i32 to index
    %c0_115 = arith.constant 0 : index
    %355 = vector.load %arg15[%354, %c0_115] : memref<64x128xf32, #tpu.memory_space<vmem>>, vector<8x128xf32>
    %cst_116 = arith.constant dense<0.000000e+00> : vector<8x128xf32>
    %356 = tpu.matmul %349, %209, %cst_116 {dimension_numbers = #tpu.dot_dimension_numbers<[1], [0], [0], [1], [0, 0, 1, 1], [], []>} : vector<8x32xf32>, vector<32x128xf32>, vector<8x128xf32> -> vector<8x128xf32>
    %357 = arith.addf %355, %356 : vector<8x128xf32>
    %358 = arith.negf %357 : vector<8x128xf32>
    %359 = math.exp %358 : vector<8x128xf32>
    %cst_117 = arith.constant 1.000000e+00 : f32
    %360 = vector.broadcast %cst_117 : f32 to vector<8x128xf32>
    %361 = arith.addf %360, %359 : vector<8x128xf32>
    %362 = arith.divf %360, %361 : vector<8x128xf32>
    %363 = math.tanh %357 : vector<8x128xf32>
    %364 = vector.extract_strided_slice %362 {offsets = [0, 0], sizes = [8, 32], strides = [1, 1]} : vector<8x128xf32> to vector<8x32xf32>
    %365 = vector.extract_strided_slice %362 {offsets = [0, 32], sizes = [8, 32], strides = [1, 1]} : vector<8x128xf32> to vector<8x32xf32>
    %366 = vector.extract_strided_slice %363 {offsets = [0, 64], sizes = [8, 32], strides = [1, 1]} : vector<8x128xf32> to vector<8x32xf32>
    %367 = vector.extract_strided_slice %362 {offsets = [0, 96], sizes = [8, 32], strides = [1, 1]} : vector<8x128xf32> to vector<8x32xf32>
    %368 = arith.mulf %365, %347 : vector<8x32xf32>
    %369 = arith.mulf %364, %366 : vector<8x32xf32>
    %370 = arith.addf %368, %369 : vector<8x32xf32>
    %371 = math.tanh %370 : vector<8x32xf32>
    %372 = arith.mulf %367, %371 : vector<8x32xf32>
    %373 = arith.index_cast %353 : i32 to index
    %c0_118 = arith.constant 0 : index
    %374 = vector.load %arg16[%373, %c0_118] : memref<64x32xf32, #tpu.memory_space<vmem>>, vector<8x32xf32>
    tpu.vector_store %arg16[%373, %c0_118], %372 {strides = array<i32>} : memref<64x32xf32, #tpu.memory_space<vmem>>, vector<8x32xf32>,
    %c7_i32_119 = arith.constant 7 : i32
    %c8_i32_120 = arith.constant 8 : i32
    %375 = arith.muli %c7_i32_119, %c8_i32_120 : i32
    %376 = tpu.assume_multiple %375, 8 : i32
    %377 = arith.index_cast %376 : i32 to index
    %c0_121 = arith.constant 0 : index
    %378 = vector.load %arg15[%377, %c0_121] : memref<64x128xf32, #tpu.memory_space<vmem>>, vector<8x128xf32>
    %cst_122 = arith.constant dense<0.000000e+00> : vector<8x128xf32>
    %379 = tpu.matmul %372, %209, %cst_122 {dimension_numbers = #tpu.dot_dimension_numbers<[1], [0], [0], [1], [0, 0, 1, 1], [], []>} : vector<8x32xf32>, vector<32x128xf32>, vector<8x128xf32> -> vector<8x128xf32>
    %380 = arith.addf %378, %379 : vector<8x128xf32>
    %381 = arith.negf %380 : vector<8x128xf32>
    %382 = math.exp %381 : vector<8x128xf32>
    %cst_123 = arith.constant 1.000000e+00 : f32
    %383 = vector.broadcast %cst_123 : f32 to vector<8x128xf32>
    %384 = arith.addf %383, %382 : vector<8x128xf32>
    %385 = arith.divf %383, %384 : vector<8x128xf32>
    %386 = math.tanh %380 : vector<8x128xf32>
    %387 = vector.extract_strided_slice %385 {offsets = [0, 0], sizes = [8, 32], strides = [1, 1]} : vector<8x128xf32> to vector<8x32xf32>
    %388 = vector.extract_strided_slice %385 {offsets = [0, 32], sizes = [8, 32], strides = [1, 1]} : vector<8x128xf32> to vector<8x32xf32>
    %389 = vector.extract_strided_slice %386 {offsets = [0, 64], sizes = [8, 32], strides = [1, 1]} : vector<8x128xf32> to vector<8x32xf32>
    %390 = vector.extract_strided_slice %385 {offsets = [0, 96], sizes = [8, 32], strides = [1, 1]} : vector<8x128xf32> to vector<8x32xf32>
    %391 = arith.mulf %388, %370 : vector<8x32xf32>
    %392 = arith.mulf %387, %389 : vector<8x32xf32>
    %393 = arith.addf %391, %392 : vector<8x32xf32>
    %394 = math.tanh %393 : vector<8x32xf32>
    %395 = arith.mulf %390, %394 : vector<8x32xf32>
    %396 = arith.index_cast %376 : i32 to index
    %c0_124 = arith.constant 0 : index
    %397 = vector.load %arg16[%396, %c0_124] : memref<64x32xf32, #tpu.memory_space<vmem>>, vector<8x32xf32>
    tpu.vector_store %arg16[%396, %c0_124], %395 {strides = array<i32>} : memref<64x32xf32, #tpu.memory_space<vmem>>, vector<8x32xf32>,
    %c8_i32_125 = arith.constant 8 : i32
    %c1_126 = arith.constant 1 : index
    %c0_127 = arith.constant 0 : index
    %c0_128 = arith.constant 0 : index
    %398 = vector.load %arg13[%c1_126, %c0_127, %c0_128] : memref<2x8x32xf32, #tpu.memory_space<vmem>>, vector<1x8x32xf32>
    %399 = vector.shape_cast %398 : vector<1x8x32xf32> to vector<8x32xf32>
    %400 = vector.shape_cast %395 : vector<8x32xf32> to vector<1x8x32xf32>
    tpu.vector_store %arg13[%c1_126, %c0_127, %c0_128], %400 {strides = array<i32>} : memref<2x8x32xf32, #tpu.memory_space<vmem>>, vector<1x8x32xf32>,
    %c1_129 = arith.constant 1 : index
    %c0_130 = arith.constant 0 : index
    %c0_131 = arith.constant 0 : index
    %401 = vector.load %arg14[%c1_129, %c0_130, %c0_131] : memref<2x8x32xf32, #tpu.memory_space<vmem>>, vector<1x8x32xf32>
    %402 = vector.shape_cast %401 : vector<1x8x32xf32> to vector<8x32xf32>
    %403 = vector.shape_cast %393 : vector<8x32xf32> to vector<1x8x32xf32>
    tpu.vector_store %arg14[%c1_129, %c0_130, %c0_131], %403 {strides = array<i32>} : memref<2x8x32xf32, #tpu.memory_space<vmem>>, vector<1x8x32xf32>,
    %c0_132 = arith.constant 0 : index
    %c0_133 = arith.constant 0 : index
    %404 = vector.load %arg16[%c0_132, %c0_133] : memref<64x32xf32, #tpu.memory_space<vmem>>, vector<64x32xf32>
    %c0_134 = arith.constant 0 : index
    %c0_135 = arith.constant 0 : index
    %405 = vector.load %arg10[%c0_134, %c0_135] : memref<32x256xf32, #tpu.memory_space<vmem>>, vector<32x256xf32>
    %cst_136 = arith.constant dense<0.000000e+00> : vector<64x256xf32>
    %406 = tpu.matmul %404, %405, %cst_136 {dimension_numbers = #tpu.dot_dimension_numbers<[1], [0], [0], [1], [0, 0, 1, 1], [], []>} : vector<64x32xf32>, vector<32x256xf32>, vector<64x256xf32> -> vector<64x256xf32>
    %c0_137 = arith.constant 0 : index
    %c0_138 = arith.constant 0 : index
    %407 = vector.load %arg11[%c0_137, %c0_138] : memref<1x256xf32, #tpu.memory_space<vmem>>, vector<1x256xf32>
    %408 = vector.broadcast %407 : vector<1x256xf32> to vector<64x256xf32>
    %409 = arith.addf %406, %408 : vector<64x256xf32>
    %c0_139 = arith.constant 0 : index
    %c0_140 = arith.constant 0 : index
    %410 = vector.load %arg12[%c0_139, %c0_140] : memref<64x256xf32, #tpu.memory_space<vmem>>, vector<64x256xf32>
    tpu.vector_store %arg12[%c0_139, %c0_140], %409 {strides = array<i32>} : memref<64x256xf32, #tpu.memory_space<vmem>>, vector<64x256xf32>,
    return
  }
  func.func @transform_0(%arg0: i32) -> (i32, i32) {
    %c0_i32 = arith.constant 0 : i32
    %c0_i32_0 = arith.constant 0 : i32
    %c0_i32_1 = arith.constant 0 : i32
    return %c0_i32, %c0_i32_0 : i32, i32
  }
  func.func @transform_1(%arg0: i32) -> (i32, i32) {
    %c0_i32 = arith.constant 0 : i32
    %c0_i32_0 = arith.constant 0 : i32
    %c0_i32_1 = arith.constant 0 : i32
    return %c0_i32, %c0_i32_0 : i32, i32
  }
  func.func @transform_2(%arg0: i32) -> (i32, i32) {
    %c0_i32 = arith.constant 0 : i32
    %c0_i32_0 = arith.constant 0 : i32
    %c0_i32_1 = arith.constant 0 : i32
    return %c0_i32, %c0_i32_0 : i32, i32
  }
  func.func @transform_3(%arg0: i32) -> (i32, i32) {
    %c0_i32 = arith.constant 0 : i32
    %c0_i32_0 = arith.constant 0 : i32
    %c0_i32_1 = arith.constant 0 : i32
    return %c0_i32, %c0_i32_0 : i32, i32
  }
  func.func @transform_4(%arg0: i32) -> (i32, i32) {
    %c0_i32 = arith.constant 0 : i32
    %c0_i32_0 = arith.constant 0 : i32
    %c0_i32_1 = arith.constant 0 : i32
    return %c0_i32, %c0_i32_0 : i32, i32
  }
  func.func @transform_5(%arg0: i32) -> (i32, i32) {
    %c0_i32 = arith.constant 0 : i32
    %c0_i32_0 = arith.constant 0 : i32
    %c0_i32_1 = arith.constant 0 : i32
    return %c0_i32, %c0_i32_0 : i32, i32
  }
  func.func @transform_6(%arg0: i32) -> (i32, i32) {
    %c0_i32 = arith.constant 0 : i32
    %c0_i32_0 = arith.constant 0 : i32
    %c0_i32_1 = arith.constant 0 : i32
    return %c0_i32, %c0_i32_0 : i32, i32
  }
  func.func @transform_7(%arg0: i32) -> (i32, i32, i32) {
    %c0_i32 = arith.constant 0 : i32
    %c0_i32_0 = arith.constant 0 : i32
    %c0_i32_1 = arith.constant 0 : i32
    %c0_i32_2 = arith.constant 0 : i32
    return %c0_i32, %c0_i32_0, %c0_i32_1 : i32, i32, i32
  }
  func.func @transform_8(%arg0: i32) -> (i32, i32, i32) {
    %c0_i32 = arith.constant 0 : i32
    %c0_i32_0 = arith.constant 0 : i32
    %c0_i32_1 = arith.constant 0 : i32
    %c0_i32_2 = arith.constant 0 : i32
    return %c0_i32, %c0_i32_0, %c0_i32_1 : i32, i32, i32
  }
  func.func @transform_9(%arg0: i32) -> (i32, i32) {
    %c0_i32 = arith.constant 0 : i32
    %c0_i32_0 = arith.constant 0 : i32
    %c0_i32_1 = arith.constant 0 : i32
    return %c0_i32, %c0_i32_0 : i32, i32
  }
  func.func @transform_10(%arg0: i32) -> (i32, i32) {
    %c0_i32 = arith.constant 0 : i32
    %c0_i32_0 = arith.constant 0 : i32
    %c0_i32_1 = arith.constant 0 : i32
    return %c0_i32, %c0_i32_0 : i32, i32
  }
  func.func @transform_11(%arg0: i32) -> (i32, i32) {
    %c0_i32 = arith.constant 0 : i32
    %c0_i32_0 = arith.constant 0 : i32
    %c0_i32_1 = arith.constant 0 : i32
    return %c0_i32, %c0_i32_0 : i32, i32
  }
  func.func @transform_12(%arg0: i32) -> (i32, i32, i32) {
    %c0_i32 = arith.constant 0 : i32
    %c0_i32_0 = arith.constant 0 : i32
    %c0_i32_1 = arith.constant 0 : i32
    %c0_i32_2 = arith.constant 0 : i32
    return %c0_i32, %c0_i32_0, %c0_i32_1 : i32, i32, i32
  }
  func.func @transform_13(%arg0: i32) -> (i32, i32, i32) {
    %c0_i32 = arith.constant 0 : i32
    %c0_i32_0 = arith.constant 0 : i32
    %c0_i32_1 = arith.constant 0 : i32
    %c0_i32_2 = arith.constant 0 : i32
    return %c0_i32, %c0_i32_0, %c0_i32_1 : i32, i32, i32
  }
}

</mosaic_0001>

<llo_original>
// kernel: tpu_custom_call.1
$region0: #{tpu_custom_call.1}
  #allocation0 [shape = 'u32[]', space=smem, size = 0x4, offset = 0x4, fixed_abs, tag = 'smem constant byte address 0x4 - core index']
  #allocation1 [shape = 'u32[72,128]{1,0:T(1,128)}', space=vmem, size = 0x9000, scoped, tag = 'internal scratch']
  #allocation2 [shape = 'f32[64,128]{1,0:T(8,128)}', space=vmem, size = 0x8000, scoped, tag = 'scratch operand']
  #allocation3 [shape = 'f32[64,32]{1,0:T(8,128)}', space=vmem, size = 0x8000, scoped, tag = 'scratch operand']
  %s0 = inlined_call_operand.vmem [shape: f32[64,32], index: 0, kind: input, shape index: {}]
  %s1 = inlined_call_operand.vmem [shape: f32[32,128], index: 1, kind: input, shape index: {}]
  %s2 = inlined_call_operand.hbm [shape: f32[32,128], index: 2, kind: input, shape index: {}]
  %s3 = inlined_call_operand.vmem [shape: f32[1,128], index: 3, kind: input, shape index: {}]
  %s4 = inlined_call_operand.hbm [shape: f32[32,128], index: 4, kind: input, shape index: {}]
  %s5 = inlined_call_operand.hbm [shape: f32[32,128], index: 5, kind: input, shape index: {}]
  %s6 = inlined_call_operand.vmem [shape: f32[1,128], index: 6, kind: input, shape index: {}]
  %s7 = inlined_call_operand.hbm [shape: f32[2,8,32], index: 7, kind: input, shape index: {}]
  %s8 = inlined_call_operand.hbm [shape: f32[2,8,32], index: 8, kind: input, shape index: {}]
  %s9 = inlined_call_operand.vmem [shape: f32[32,256], index: 9, kind: input, shape index: {}]
  %s10 = inlined_call_operand.vmem [shape: f32[1,256], index: 10, kind: input, shape index: {}]
  %s11 = inlined_call_operand.hbm [shape: f32[64,256], index: 11, kind: output, shape index: {0}]
  %s12 = inlined_call_operand.hbm [shape: f32[2,8,32], index: 12, kind: output, shape index: {1}]
  %s13 = inlined_call_operand.hbm [shape: f32[2,8,32], index: 13, kind: output, shape index: {2}]
  %14 = xla_tuple %s11, %s12, %s13
  %s15 = sld [smem:[#allocation0]]
  $region90: #{tpu_custom_call.1} parent=0
    _
  %s17 = ssub.s32 1, %s15
  %s18 = scalar_select 0, %s17, %s15
  $region1: #{tpu_custom_call.1} parent=0
    #allocation4 [shape = 'u8[16384]{0}', space=vmem, size = 0x4000, scoped, tag = 'input window, operand 2, single buffered']
    #allocation5 [shape = 's32[1]{0}', space=sflag, size = 0x4, scoped, tag = 'scoped memory for tpu_custom_call.1']
    #allocation6 [shape = 's32[1]{0}', space=sflag, size = 0x4, scoped, tag = 'scoped memory for tpu_custom_call.1']
    #allocation7 [shape = 'u8[16384]{0}', space=vmem, size = 0x4000, scoped, tag = 'input window, operand 4, single buffered']
    #allocation8 [shape = 's32[1]{0}', space=sflag, size = 0x4, scoped, tag = 'scoped memory for tpu_custom_call.1']
    #allocation9 [shape = 'u8[16384]{0}', space=vmem, size = 0x4000, scoped, tag = 'input window, operand 5, single buffered']
    #allocation10 [shape = 'u8[8192]{0}', space=vmem, size = 0x2000, scoped, tag = 'input window, operand 7, single buffered']
    #allocation11 [shape = 's32[1]{0}', space=sflag, size = 0x4, scoped, tag = 'scoped memory for tpu_custom_call.1']
    #allocation12 [shape = 'u8[8192]{0}', space=vmem, size = 0x2000, scoped, tag = 'input window, operand 8, single buffered']
    #allocation13 [shape = 'u8[65536]{0}', space=vmem, size = 0x10000, scoped, tag = 'output window, operand 0, single buffered']
    #allocation14 [shape = 'u8[8192]{0}', space=vmem, size = 0x2000, scoped, tag = 'output window, operand 1, single buffered']
    #allocation15 [shape = 's32[1]{0}', space=sflag, size = 0x4, scoped, tag = 'scoped memory for tpu_custom_call.1']
    #allocation16 [shape = 'u8[8192]{0}', space=vmem, size = 0x2000, scoped, tag = 'output window, operand 2, single buffered']
    %19 = vsyncpa [#allocation5], 0
    %20 = vsyncpa [#allocation8], 0
    %21 = vsyncpa [#allocation11], 0
    %22 = vsyncpa [#allocation6], 0
    %23 = vsyncpa [#allocation15], 0
    // Predicated region
    $region2: #{tpu_custom_call.1} parent=1 // pred_check
      _
    $region3: #{tpu_custom_call.1} parent=1 // pred_check_branch
      %25 = sbr.rel (0) target = $region5
    $region4: #{tpu_custom_call.1} parent=1 // pred_region
      _
    $region5: #{tpu_custom_call.1} parent=1 // pred_fallthru
      _
    // Predicated region
    $region6: #{tpu_custom_call.1} parent=1 // pred_check
      _
    $region7: #{tpu_custom_call.1} parent=1 // pred_check_branch
      %27 = sbr.rel (0) target = $region9
    $region8: #{tpu_custom_call.1} parent=1 // pred_region
      _
    $region9: #{tpu_custom_call.1} parent=1 // pred_fallthru
      _
    // Predicated region
    $region10: #{tpu_custom_call.1} parent=1 // pred_check
      _
    $region11: #{tpu_custom_call.1} parent=1 // pred_check_branch
      %29 = sbr.rel (0) target = $region13
    $region12: #{tpu_custom_call.1} parent=1 // pred_region
      %31 = vsyncadd [#allocation5], 0
      %s32 = sshll.u32 %s2, 4
      %s33 = int_to_ptr.hbm [resolvable:$true] %s32
      %s34 = sshll.u32 [#allocation4], 4
      %s35 = int_to_ptr.vmem [resolvable:$true] %s34
      %40 = dma.hbm_to_vmem [thread:$0]  %s33, 512, %s35, [#allocation5], 128, 128, 8
    $region13: #{tpu_custom_call.1} parent=1 // pred_fallthru
      _
    // Predicated region
    $region14: #{tpu_custom_call.1} parent=1 // pred_check
      _
    $region15: #{tpu_custom_call.1} parent=1 // pred_check_branch
      %42 = sbr.rel (0) target = $region17
    $region16: #{tpu_custom_call.1} parent=1 // pred_region
      _
    $region17: #{tpu_custom_call.1} parent=1 // pred_fallthru
      _
    // Predicated region
    $region18: #{tpu_custom_call.1} parent=1 // pred_check
      _
    $region19: #{tpu_custom_call.1} parent=1 // pred_check_branch
      %44 = sbr.rel (0) target = $region21
    $region20: #{tpu_custom_call.1} parent=1 // pred_region
      %46 = vsyncadd [#allocation8], 0
      %s47 = sshll.u32 %s4, 4
      %s48 = int_to_ptr.hbm [resolvable:$true] %s47
      %s49 = sshll.u32 [#allocation7], 4
      %s50 = int_to_ptr.vmem [resolvable:$true] %s49
      %55 = dma.hbm_to_vmem [thread:$0]  %s48, 512, %s50, [#allocation8], 128, 128, 8
    $region21: #{tpu_custom_call.1} parent=1 // pred_fallthru
      _
    // Predicated region
    $region22: #{tpu_custom_call.1} parent=1 // pred_check
      _
    $region23: #{tpu_custom_call.1} parent=1 // pred_check_branch
      %57 = sbr.rel (0) target = $region25
    $region24: #{tpu_custom_call.1} parent=1 // pred_region
      %59 = vsyncadd [#allocation8], 0
      %s60 = sshll.u32 %s5, 4
      %s61 = int_to_ptr.hbm [resolvable:$true] %s60
      %s62 = sshll.u32 [#allocation9], 4
      %s63 = int_to_ptr.vmem [resolvable:$true] %s62
      %68 = dma.hbm_to_vmem [thread:$0]  %s61, 512, %s63, [#allocation8], 128, 128, 8
    $region25: #{tpu_custom_call.1} parent=1 // pred_fallthru
      _
    // Predicated region
    $region26: #{tpu_custom_call.1} parent=1 // pred_check
      _
    $region27: #{tpu_custom_call.1} parent=1 // pred_check_branch
      %70 = sbr.rel (0) target = $region29
    $region28: #{tpu_custom_call.1} parent=1 // pred_region
      _
    $region29: #{tpu_custom_call.1} parent=1 // pred_fallthru
      _
    // Predicated region
    $region30: #{tpu_custom_call.1} parent=1 // pred_check
      _
    $region31: #{tpu_custom_call.1} parent=1 // pred_check_branch
      %72 = sbr.rel (0) target = $region33
    $region32: #{tpu_custom_call.1} parent=1 // pred_region
      %74 = vsyncadd [#allocation11], 0
      %s75 = sshll.u32 %s7, 4
      %s76 = int_to_ptr.hbm [resolvable:$true] %s75
      %s77 = sshll.u32 [#allocation10], 4
      %s78 = int_to_ptr.vmem [resolvable:$true] %s77
      %83 = dma.hbm_to_vmem [thread:$0]  %s76, 256, %s78, [#allocation11], 128, 128, 8
    $region33: #{tpu_custom_call.1} parent=1 // pred_fallthru
      _
    // Predicated region
    $region34: #{tpu_custom_call.1} parent=1 // pred_check
      _
    $region35: #{tpu_custom_call.1} parent=1 // pred_check_branch
      %85 = sbr.rel (0) target = $region37
    $region36: #{tpu_custom_call.1} parent=1 // pred_region
      %87 = vsyncadd [#allocation11], 0
      %s88 = sshll.u32 %s8, 4
      %s89 = int_to_ptr.hbm [resolvable:$true] %s88
      %s90 = sshll.u32 [#allocation12], 4
      %s91 = int_to_ptr.vmem [resolvable:$true] %s90
      %96 = dma.hbm_to_vmem [thread:$0]  %s89, 256, %s91, [#allocation11], 128, 128, 8
    $region37: #{tpu_custom_call.1} parent=1 // pred_fallthru
      _
    // Predicated region
    $region38: #{tpu_custom_call.1} parent=1 // pred_check
      _
    $region39: #{tpu_custom_call.1} parent=1 // pred_check_branch
      %98 = sbr.rel (0) target = $region41
    $region40: #{tpu_custom_call.1} parent=1 // pred_region
      _
    $region41: #{tpu_custom_call.1} parent=1 // pred_fallthru
      _
    // Predicated region
    $region42: #{tpu_custom_call.1} parent=1 // pred_check
      _
    $region43: #{tpu_custom_call.1} parent=1 // pred_check_branch
      %100 = sbr.rel (0) target = $region45
    $region44: #{tpu_custom_call.1} parent=1 // pred_region
      _
    $region45: #{tpu_custom_call.1} parent=1 // pred_fallthru
      _
    // Predicated region
    $region46: #{tpu_custom_call.1} parent=1 // pred_check
      _
    $region47: #{tpu_custom_call.1} parent=1 // pred_check_branch
      %102 = sbr.rel (0) target = $region49
    $region48: #{tpu_custom_call.1} parent=1 // pred_region
      %104 = dma.done [#allocation5], 512
    $region49: #{tpu_custom_call.1} parent=1 // pred_fallthru
      _
    // Predicated region
    $region50: #{tpu_custom_call.1} parent=1 // pred_check
      _
    $region51: #{tpu_custom_call.1} parent=1 // pred_check_branch
      %106 = sbr.rel (0) target = $region53
    $region52: #{tpu_custom_call.1} parent=1 // pred_region
      %108 = dma.done [#allocation8], 512
    $region53: #{tpu_custom_call.1} parent=1 // pred_fallthru
      _
    // Predicated region
    $region54: #{tpu_custom_call.1} parent=1 // pred_check
      _
    $region55: #{tpu_custom_call.1} parent=1 // pred_check_branch
      %110 = sbr.rel (0) target = $region57
    $region56: #{tpu_custom_call.1} parent=1 // pred_region
      %112 = dma.done [#allocation8], 512
    $region57: #{tpu_custom_call.1} parent=1 // pred_fallthru
      _
    // Predicated region
    $region58: #{tpu_custom_call.1} parent=1 // pred_check
      _
    $region59: #{tpu_custom_call.1} parent=1 // pred_check_branch
      %114 = sbr.rel (0) target = $region61
    $region60: #{tpu_custom_call.1} parent=1 // pred_region
      %116 = dma.done [#allocation11], 256
    $region61: #{tpu_custom_call.1} parent=1 // pred_fallthru
      _
    // Predicated region
    $region62: #{tpu_custom_call.1} parent=1 // pred_check
      _
    $region63: #{tpu_custom_call.1} parent=1 // pred_check_branch
      %118 = sbr.rel (0) target = $region65
    $region64: #{tpu_custom_call.1} parent=1 // pred_region
      %120 = dma.done [#allocation11], 256
    $region65: #{tpu_custom_call.1} parent=1 // pred_fallthru
      _
    %v121 = vld [vmem:[%s0] sm:$0xff]
    %v122 = vld [vmem:[%s0 + $0x8] sm:$0xff]
    %v123 = vld [vmem:[%s0 + $0x10] sm:$0xff]
    %v124 = vld [vmem:[%s0 + $0x18] sm:$0xff]
    %v125 = vld [vmem:[%s0 + $0x20] sm:$0xff]
    %v126 = vld [vmem:[%s0 + $0x28] sm:$0xff]
    %v127 = vld [vmem:[%s0 + $0x30] sm:$0xff]
    %v128 = vld [vmem:[%s0 + $0x38] sm:$0xff]
    %v129 = vld [vmem:[%s1] sm:$0xff]
    %v130 = vld [vmem:[%s1 + $0x8] sm:$0xff]
    %v131 = vld [vmem:[%s1 + $0x10] sm:$0xff]
    %v132 = vld [vmem:[%s1 + $0x18] sm:$0xff]
    %v133 = vld [vmem:[%s3] sm:$0x1]
    %v135 = vperm.slane %v133, 0
    %vm137 = vcmask 261120
    %v139 = vsel %vm137, %v121, 0
    %v142 = vsel %vm137, %v122, 0
    %v145 = vsel %vm137, %v123, 0
    %v148 = vsel %vm137, %v124, 0
    %v151 = vsel %vm137, %v125, 0
    %v154 = vsel %vm137, %v126, 0
    %v157 = vsel %vm137, %v127, 0
    %v160 = vsel %vm137, %v128, 0
    %162 = vmatpush.msra.mxu0 0.0
    %163 = vmatpush.msra.mxu0 0.0
    %164 = vmatpush.msra.mxu0 0.0
    %165 = vmatpush.msra.mxu0 0.0
    %166 = vmatpush.msra.mxu0 0.0
    %167 = vmatpush.msra.mxu0 0.0
    %168 = vmatpush.msra.mxu0 0.0
    %169 = vmatpush.msra.mxu0 0.0
    %170 = vmatpush.msra.mxu0 0.0
    %171 = vmatpush.msra.mxu0 0.0
    %172 = vmatpush.msra.mxu0 0.0
    %173 = vmatpush.msra.mxu0 0.0
    %174 = vmatpush.msra.mxu0 %v132
    %175 = vmatpush.msra.mxu0 %v131
    %176 = vmatpush.msra.mxu0 %v130
    %177 = vmatpush.msra.mxu0 %v129
    %178 = vmatmul.f32.gmra.mxu0 %v139
    %v179 = vpop.f32.mrf.mxu0
    %v180 = vadd.f32 %v135, %v179
    %181 = vmatmul.f32.gmra.mxu0 %v142
    %v182 = vpop.f32.mrf.mxu0
    %v183 = vadd.f32 %v135, %v182
    %184 = vmatmul.f32.gmra.mxu0 %v145
    %v185 = vpop.f32.mrf.mxu0
    %v186 = vadd.f32 %v135, %v185
    %187 = vmatmul.f32.gmra.mxu0 %v148
    %v188 = vpop.f32.mrf.mxu0
    %v189 = vadd.f32 %v135, %v188
    %190 = vmatmul.f32.gmra.mxu0 %v151
    %v191 = vpop.f32.mrf.mxu0
    %v192 = vadd.f32 %v135, %v191
    %193 = vmatmul.f32.gmra.mxu0 %v154
    %v194 = vpop.f32.mrf.mxu0
    %v195 = vadd.f32 %v135, %v194
    %196 = vmatmul.f32.gmra.mxu0 %v157
    %v197 = vpop.f32.mrf.mxu0
    %v198 = vadd.f32 %v135, %v197
    %199 = vmatmul.f32.gmra.mxu0 %v160
    %v200 = vpop.f32.mrf.mxu0
    %v201 = vadd.f32 %v135, %v200
    %202 = vdwg.mxu0
    %203 = vst [vmem:[#allocation2] sm:$0xff] %v180
    %204 = vst [vmem:[#allocation2 + $0x8] sm:$0xff] %v183
    %205 = vst [vmem:[#allocation2 + $0x10] sm:$0xff] %v186
    %206 = vst [vmem:[#allocation2 + $0x18] sm:$0xff] %v189
    %207 = vst [vmem:[#allocation2 + $0x20] sm:$0xff] %v192
    %208 = vst [vmem:[#allocation2 + $0x28] sm:$0xff] %v195
    %209 = vst [vmem:[#allocation2 + $0x30] sm:$0xff] %v198
    %210 = vst [vmem:[#allocation2 + $0x38] sm:$0xff] %v201
    %v211 = vld [vmem:[#allocation4] sm:$0xff]
    %v212 = vld [vmem:[#allocation4 + $0x8] sm:$0xff]
    %v213 = vld [vmem:[#allocation4 + $0x10] sm:$0xff]
    %v214 = vld [vmem:[#allocation4 + $0x18] sm:$0xff]
    %v215 = vld [vmem:[#allocation10] sm:$0xff]
    %v216 = vld [vmem:[#allocation12] sm:$0xff]
    %v217 = vld [vmem:[#allocation2] sm:$0xff]
    %v219 = vsel %vm137, %v215, 0
    %221 = vmatpush.msra.mxu0 0.0
    %222 = vmatpush.msra.mxu0 0.0
    %223 = vmatpush.msra.mxu0 0.0
    %224 = vmatpush.msra.mxu0 0.0
    %225 = vmatpush.msra.mxu0 0.0
    %226 = vmatpush.msra.mxu0 0.0
    %227 = vmatpush.msra.mxu0 0.0
    %228 = vmatpush.msra.mxu0 0.0
    %229 = vmatpush.msra.mxu0 0.0
    %230 = vmatpush.msra.mxu0 0.0
    %231 = vmatpush.msra.mxu0 0.0
    %232 = vmatpush.msra.mxu0 0.0
    %233 = vmatpush.msra.mxu0 %v214
    %234 = vmatpush.msra.mxu0 %v213
    %235 = vmatpush.msra.mxu0 %v212
    %236 = vmatpush.msra.mxu0 %v211
    %237 = vmatmul.f32.gmra.mxu0 %v219
    %v238 = vpop.f32.mrf.mxu0
    %v239 = vadd.f32 0.0, %v238
    %240 = vdwg.mxu0
    %v241 = vadd.f32 %v217, %v239
    %v242 = vxor.u32 %v241, 2147483648
    %v243 = vmul.f32 %v242, 1.442695
    %v244 = vpow.pop %v243
    %v245 = vadd.f32 %v244, 1.0
    %v246 = vrcp.pop %v245
    %v247 = vmul.f32 %v245, %v246
    %v248 = vsub.f32 1.0, %v247
    %v249 = vmul.f32 %v246, %v248
    %v250 = vadd.f32 %v246, %v249
    %vm251 = vweird.f32 %v245
    %vm252 = vweird.f32 %v246
    %vm253 = vmor %vm251, %vm252
    %v254 = vsel %vm253, %v246, %v250
    %v255 = vand.u32 2147483647, %v245
    %vm256 = vcmp.eq.f32.partialorder %v255, 8.507059e+37
    %v257 = vand.u32 %v245, 2147483648
    %v258 = vor.u32 1.1754944e-38, %v257
    %v259 = vsel %vm256, %v258, %v254
    %v260 = vmul.f32 1.0, %v259
    %v261 = vtanh.pop %v241
    %263 = vrot.lane.b32.xlu0 %v216, 32
    %v264 = vpop.permute.xlu0 %263
    %v266 = vmul.f32 %v260, %v264
    %268 = vrot.lane.b32.xlu0 %v261, 64
    %v269 = vpop.permute.xlu0 %268
    %v271 = vmul.f32 %v260, %v269
    %273 = vrot.lane.b32.xlu0 %v271, 32
    %v274 = vpop.permute.xlu0 %273
    %v276 = vadd.f32 %v266, %v274
    %v277 = vtanh.pop %v276
    %279 = vrot.lane.b32.xlu0 %v277, 64
    %v280 = vpop.permute.xlu0 %279
    %v282 = vmul.f32 %v260, %v280
    %284 = vrot.lane.b32.xlu0 %v282, 32
    %v285 = vpop.permute.xlu0 %284
    %287 = vst.msk [vmem:[#allocation3] sm:$0xff] %vm137, %v285
    %s288 = scalar_lea.vmem [#allocation2], 8
    %v289 = vld [vmem:[%s288] sm:$0xff]
    %v290 = vsel %vm137, %v285, 0
    %292 = vmatpush.msra.mxu0 0.0
    %293 = vmatpush.msra.mxu0 0.0
    %294 = vmatpush.msra.mxu0 0.0
    %295 = vmatpush.msra.mxu0 0.0
    %296 = vmatpush.msra.mxu0 0.0
    %297 = vmatpush.msra.mxu0 0.0
    %298 = vmatpush.msra.mxu0 0.0
    %299 = vmatpush.msra.mxu0 0.0
    %300 = vmatpush.msra.mxu0 0.0
    %301 = vmatpush.msra.mxu0 0.0
    %302 = vmatpush.msra.mxu0 0.0
    %303 = vmatpush.msra.mxu0 0.0
    %304 = vmatpush.msra.mxu0 %v214
    %305 = vmatpush.msra.mxu0 %v213
    %306 = vmatpush.msra.mxu0 %v212
    %307 = vmatpush.msra.mxu0 %v211
    %308 = vmatmul.f32.gmra.mxu0 %v290
    %v309 = vpop.f32.mrf.mxu0
    %v310 = vadd.f32 0.0, %v309
    %311 = vdwg.mxu0
    %v312 = vadd.f32 %v289, %v310
    %v313 = vxor.u32 %v312, 2147483648
    %v314 = vmul.f32 %v313, 1.442695
    %v315 = vpow.pop %v314
    %v316 = vadd.f32 %v315, 1.0
    %v317 = vrcp.pop %v316
    %v318 = vmul.f32 %v316, %v317
    %v319 = vsub.f32 1.0, %v318
    %v320 = vmul.f32 %v317, %v319
    %v321 = vadd.f32 %v317, %v320
    %vm322 = vweird.f32 %v316
    %vm323 = vweird.f32 %v317
    %vm324 = vmor %vm322, %vm323
    %v325 = vsel %vm324, %v317, %v321
    %v326 = vand.u32 2147483647, %v316
    %vm327 = vcmp.eq.f32.partialorder %v326, 8.507059e+37
    %v328 = vand.u32 %v316, 2147483648
    %v329 = vor.u32 1.1754944e-38, %v328
    %v330 = vsel %vm327, %v329, %v325
    %v331 = vmul.f32 1.0, %v330
    %v332 = vtanh.pop %v312
    %v333 = vmul.f32 %v331, %v276
    %335 = vrot.lane.b32.xlu0 %v332, 64
    %v336 = vpop.permute.xlu0 %335
    %v338 = vmul.f32 %v331, %v336
    %340 = vrot.lane.b32.xlu0 %v338, 32
    %v341 = vpop.permute.xlu0 %340
    %v343 = vadd.f32 %v333, %v341
    %v344 = vtanh.pop %v343
    %346 = vrot.lane.b32.xlu0 %v344, 64
    %v347 = vpop.permute.xlu0 %346
    %v349 = vmul.f32 %v331, %v347
    %351 = vrot.lane.b32.xlu0 %v349, 32
    %v352 = vpop.permute.xlu0 %351
    %s354 = scalar_lea.vmem [#allocation3], 8
    %355 = vst.msk [vmem:[%s354] sm:$0xff] %vm137, %v352
    %s356 = scalar_lea.vmem [#allocation2], 16
    %v357 = vld [vmem:[%s356] sm:$0xff]
    %v358 = vsel %vm137, %v352, 0
    %360 = vmatpush.msra.mxu0 0.0
    %361 = vmatpush.msra.mxu0 0.0
    %362 = vmatpush.msra.mxu0 0.0
    %363 = vmatpush.msra.mxu0 0.0
    %364 = vmatpush.msra.mxu0 0.0
    %365 = vmatpush.msra.mxu0 0.0
    %366 = vmatpush.msra.mxu0 0.0
    %367 = vmatpush.msra.mxu0 0.0
    %368 = vmatpush.msra.mxu0 0.0
    %369 = vmatpush.msra.mxu0 0.0
    %370 = vmatpush.msra.mxu0 0.0
    %371 = vmatpush.msra.mxu0 0.0
    %372 = vmatpush.msra.mxu0 %v214
    %373 = vmatpush.msra.mxu0 %v213
    %374 = vmatpush.msra.mxu0 %v212
    %375 = vmatpush.msra.mxu0 %v211
    %376 = vmatmul.f32.gmra.mxu0 %v358
    %v377 = vpop.f32.mrf.mxu0
    %v378 = vadd.f32 0.0, %v377
    %379 = vdwg.mxu0
    %v380 = vadd.f32 %v357, %v378
    %v381 = vxor.u32 %v380, 2147483648
    %v382 = vmul.f32 %v381, 1.442695
    %v383 = vpow.pop %v382
    %v384 = vadd.f32 %v383, 1.0
    %v385 = vrcp.pop %v384
    %v386 = vmul.f32 %v384, %v385
    %v387 = vsub.f32 1.0, %v386
    %v388 = vmul.f32 %v385, %v387
    %v389 = vadd.f32 %v385, %v388
    %vm390 = vweird.f32 %v384
    %vm391 = vweird.f32 %v385
    %vm392 = vmor %vm390, %vm391
    %v393 = vsel %vm392, %v385, %v389
    %v394 = vand.u32 2147483647, %v384
    %vm395 = vcmp.eq.f32.partialorder %v394, 8.507059e+37
    %v396 = vand.u32 %v384, 2147483648
    %v397 = vor.u32 1.1754944e-38, %v396
    %v398 = vsel %vm395, %v397, %v393
    %v399 = vmul.f32 1.0, %v398
    %v400 = vtanh.pop %v380
    %v401 = vmul.f32 %v399, %v343
    %403 = vrot.lane.b32.xlu0 %v400, 64
    %v404 = vpop.permute.xlu0 %403
    %v406 = vmul.f32 %v399, %v404
    %408 = vrot.lane.b32.xlu0 %v406, 32
    %v409 = vpop.permute.xlu0 %408
    %v411 = vadd.f32 %v401, %v409
    %v412 = vtanh.pop %v411
    %414 = vrot.lane.b32.xlu0 %v412, 64
    %v415 = vpop.permute.xlu0 %414
    %v417 = vmul.f32 %v399, %v415
    %419 = vrot.lane.b32.xlu0 %v417, 32
    %v420 = vpop.permute.xlu0 %419
    %s422 = scalar_lea.vmem [#allocation3], 16
    %423 = vst.msk [vmem:[%s422] sm:$0xff] %vm137, %v420
    %s424 = scalar_lea.vmem [#allocation2], 24
    %v425 = vld [vmem:[%s424] sm:$0xff]
    %v426 = vsel %vm137, %v420, 0
    %428 = vmatpush.msra.mxu0 0.0
    %429 = vmatpush.msra.mxu0 0.0
    %430 = vmatpush.msra.mxu0 0.0
    %431 = vmatpush.msra.mxu0 0.0
    %432 = vmatpush.msra.mxu0 0.0
    %433 = vmatpush.msra.mxu0 0.0
    %434 = vmatpush.msra.mxu0 0.0
    %435 = vmatpush.msra.mxu0 0.0
    %436 = vmatpush.msra.mxu0 0.0
    %437 = vmatpush.msra.mxu0 0.0
    %438 = vmatpush.msra.mxu0 0.0
    %439 = vmatpush.msra.mxu0 0.0
    %440 = vmatpush.msra.mxu0 %v214
    %441 = vmatpush.msra.mxu0 %v213
    %442 = vmatpush.msra.mxu0 %v212
    %443 = vmatpush.msra.mxu0 %v211
    %444 = vmatmul.f32.gmra.mxu0 %v426
    %v445 = vpop.f32.mrf.mxu0
    %v446 = vadd.f32 0.0, %v445
    %447 = vdwg.mxu0
    %v448 = vadd.f32 %v425, %v446
    %v449 = vxor.u32 %v448, 2147483648
    %v450 = vmul.f32 %v449, 1.442695
    %v451 = vpow.pop %v450
    %v452 = vadd.f32 %v451, 1.0
    %v453 = vrcp.pop %v452
    %v454 = vmul.f32 %v452, %v453
    %v455 = vsub.f32 1.0, %v454
    %v456 = vmul.f32 %v453, %v455
    %v457 = vadd.f32 %v453, %v456
    %vm458 = vweird.f32 %v452
    %vm459 = vweird.f32 %v453
    %vm460 = vmor %vm458, %vm459
    %v461 = vsel %vm460, %v453, %v457
    %v462 = vand.u32 2147483647, %v452
    %vm463 = vcmp.eq.f32.partialorder %v462, 8.507059e+37
    %v464 = vand.u32 %v452, 2147483648
    %v465 = vor.u32 1.1754944e-38, %v464
    %v466 = vsel %vm463, %v465, %v461
    %v467 = vmul.f32 1.0, %v466
    %v468 = vtanh.pop %v448
    %v469 = vmul.f32 %v467, %v411
    %471 = vrot.lane.b32.xlu0 %v468, 64
    %v472 = vpop.permute.xlu0 %471
    %v474 = vmul.f32 %v467, %v472
    %476 = vrot.lane.b32.xlu0 %v474, 32
    %v477 = vpop.permute.xlu0 %476
    %v479 = vadd.f32 %v469, %v477
    %v480 = vtanh.pop %v479
    %482 = vrot.lane.b32.xlu0 %v480, 64
    %v483 = vpop.permute.xlu0 %482
    %v485 = vmul.f32 %v467, %v483
    %487 = vrot.lane.b32.xlu0 %v485, 32
    %v488 = vpop.permute.xlu0 %487
    %s490 = scalar_lea.vmem [#allocation3], 24
    %491 = vst.msk [vmem:[%s490] sm:$0xff] %vm137, %v488
    %s492 = scalar_lea.vmem [#allocation2], 32
    %v493 = vld [vmem:[%s492] sm:$0xff]
    %v494 = vsel %vm137, %v488, 0
    %496 = vmatpush.msra.mxu0 0.0
    %497 = vmatpush.msra.mxu0 0.0
    %498 = vmatpush.msra.mxu0 0.0
    %499 = vmatpush.msra.mxu0 0.0
    %500 = vmatpush.msra.mxu0 0.0
    %501 = vmatpush.msra.mxu0 0.0
    %502 = vmatpush.msra.mxu0 0.0
    %503 = vmatpush.msra.mxu0 0.0
    %504 = vmatpush.msra.mxu0 0.0
    %505 = vmatpush.msra.mxu0 0.0
    %506 = vmatpush.msra.mxu0 0.0
    %507 = vmatpush.msra.mxu0 0.0
    %508 = vmatpush.msra.mxu0 %v214
    %509 = vmatpush.msra.mxu0 %v213
    %510 = vmatpush.msra.mxu0 %v212
    %511 = vmatpush.msra.mxu0 %v211
    %512 = vmatmul.f32.gmra.mxu0 %v494
    %v513 = vpop.f32.mrf.mxu0
    %v514 = vadd.f32 0.0, %v513
    %515 = vdwg.mxu0
    %v516 = vadd.f32 %v493, %v514
    %v517 = vxor.u32 %v516, 2147483648
    %v518 = vmul.f32 %v517, 1.442695
    %v519 = vpow.pop %v518
    %v520 = vadd.f32 %v519, 1.0
    %v521 = vrcp.pop %v520
    %v522 = vmul.f32 %v520, %v521
    %v523 = vsub.f32 1.0, %v522
    %v524 = vmul.f32 %v521, %v523
    %v525 = vadd.f32 %v521, %v524
    %vm526 = vweird.f32 %v520
    %vm527 = vweird.f32 %v521
    %vm528 = vmor %vm526, %vm527
    %v529 = vsel %vm528, %v521, %v525
    %v530 = vand.u32 2147483647, %v520
    %vm531 = vcmp.eq.f32.partialorder %v530, 8.507059e+37
    %v532 = vand.u32 %v520, 2147483648
    %v533 = vor.u32 1.1754944e-38, %v532
    %v534 = vsel %vm531, %v533, %v529
    %v535 = vmul.f32 1.0, %v534
    %v536 = vtanh.pop %v516
    %v537 = vmul.f32 %v535, %v479
    %539 = vrot.lane.b32.xlu0 %v536, 64
    %v540 = vpop.permute.xlu0 %539
    %v542 = vmul.f32 %v535, %v540
    %544 = vrot.lane.b32.xlu0 %v542, 32
    %v545 = vpop.permute.xlu0 %544
    %v547 = vadd.f32 %v537, %v545
    %v548 = vtanh.pop %v547
    %550 = vrot.lane.b32.xlu0 %v548, 64
    %v551 = vpop.permute.xlu0 %550
    %v553 = vmul.f32 %v535, %v551
    %555 = vrot.lane.b32.xlu0 %v553, 32
    %v556 = vpop.permute.xlu0 %555
    %s558 = scalar_lea.vmem [#allocation3], 32
    %559 = vst.msk [vmem:[%s558] sm:$0xff] %vm137, %v556
    %s560 = scalar_lea.vmem [#allocation2], 40
    %v561 = vld [vmem:[%s560] sm:$0xff]
    %v562 = vsel %vm137, %v556, 0
    %564 = vmatpush.msra.mxu0 0.0
    %565 = vmatpush.msra.mxu0 0.0
    %566 = vmatpush.msra.mxu0 0.0
    %567 = vmatpush.msra.mxu0 0.0
    %568 = vmatpush.msra.mxu0 0.0
    %569 = vmatpush.msra.mxu0 0.0
    %570 = vmatpush.msra.mxu0 0.0
    %571 = vmatpush.msra.mxu0 0.0
    %572 = vmatpush.msra.mxu0 0.0
    %573 = vmatpush.msra.mxu0 0.0
    %574 = vmatpush.msra.mxu0 0.0
    %575 = vmatpush.msra.mxu0 0.0
    %576 = vmatpush.msra.mxu0 %v214
    %577 = vmatpush.msra.mxu0 %v213
    %578 = vmatpush.msra.mxu0 %v212
    %579 = vmatpush.msra.mxu0 %v211
    %580 = vmatmul.f32.gmra.mxu0 %v562
    %v581 = vpop.f32.mrf.mxu0
    %v582 = vadd.f32 0.0, %v581
    %583 = vdwg.mxu0
    %v584 = vadd.f32 %v561, %v582
    %v585 = vxor.u32 %v584, 2147483648
    %v586 = vmul.f32 %v585, 1.442695
    %v587 = vpow.pop %v586
    %v588 = vadd.f32 %v587, 1.0
    %v589 = vrcp.pop %v588
    %v590 = vmul.f32 %v588, %v589
    %v591 = vsub.f32 1.0, %v590
    %v592 = vmul.f32 %v589, %v591
    %v593 = vadd.f32 %v589, %v592
    %vm594 = vweird.f32 %v588
    %vm595 = vweird.f32 %v589
    %vm596 = vmor %vm594, %vm595
    %v597 = vsel %vm596, %v589, %v593
    %v598 = vand.u32 2147483647, %v588
    %vm599 = vcmp.eq.f32.partialorder %v598, 8.507059e+37
    %v600 = vand.u32 %v588, 2147483648
    %v601 = vor.u32 1.1754944e-38, %v600
    %v602 = vsel %vm599, %v601, %v597
    %v603 = vmul.f32 1.0, %v602
    %v604 = vtanh.pop %v584
    %v605 = vmul.f32 %v603, %v547
    %607 = vrot.lane.b32.xlu0 %v604, 64
    %v608 = vpop.permute.xlu0 %607
    %v610 = vmul.f32 %v603, %v608
    %612 = vrot.lane.b32.xlu0 %v610, 32
    %v613 = vpop.permute.xlu0 %612
    %v615 = vadd.f32 %v605, %v613
    %v616 = vtanh.pop %v615
    %618 = vrot.lane.b32.xlu0 %v616, 64
    %v619 = vpop.permute.xlu0 %618
    %v621 = vmul.f32 %v603, %v619
    %623 = vrot.lane.b32.xlu0 %v621, 32
    %v624 = vpop.permute.xlu0 %623
    %s626 = scalar_lea.vmem [#allocation3], 40
    %627 = vst.msk [vmem:[%s626] sm:$0xff] %vm137, %v624
    %s628 = scalar_lea.vmem [#allocation2], 48
    %v629 = vld [vmem:[%s628] sm:$0xff]
    %v630 = vsel %vm137, %v624, 0
    %632 = vmatpush.msra.mxu0 0.0
    %633 = vmatpush.msra.mxu0 0.0
    %634 = vmatpush.msra.mxu0 0.0
    %635 = vmatpush.msra.mxu0 0.0
    %636 = vmatpush.msra.mxu0 0.0
    %637 = vmatpush.msra.mxu0 0.0
    %638 = vmatpush.msra.mxu0 0.0
    %639 = vmatpush.msra.mxu0 0.0
    %640 = vmatpush.msra.mxu0 0.0
    %641 = vmatpush.msra.mxu0 0.0
    %642 = vmatpush.msra.mxu0 0.0
    %643 = vmatpush.msra.mxu0 0.0
    %644 = vmatpush.msra.mxu0 %v214
    %645 = vmatpush.msra.mxu0 %v213
    %646 = vmatpush.msra.mxu0 %v212
    %647 = vmatpush.msra.mxu0 %v211
    %648 = vmatmul.f32.gmra.mxu0 %v630
    %v649 = vpop.f32.mrf.mxu0
    %v650 = vadd.f32 0.0, %v649
    %651 = vdwg.mxu0
    %v652 = vadd.f32 %v629, %v650
    %v653 = vxor.u32 %v652, 2147483648
    %v654 = vmul.f32 %v653, 1.442695
    %v655 = vpow.pop %v654
    %v656 = vadd.f32 %v655, 1.0
    %v657 = vrcp.pop %v656
    %v658 = vmul.f32 %v656, %v657
    %v659 = vsub.f32 1.0, %v658
    %v660 = vmul.f32 %v657, %v659
    %v661 = vadd.f32 %v657, %v660
    %vm662 = vweird.f32 %v656
    %vm663 = vweird.f32 %v657
    %vm664 = vmor %vm662, %vm663
    %v665 = vsel %vm664, %v657, %v661
    %v666 = vand.u32 2147483647, %v656
    %vm667 = vcmp.eq.f32.partialorder %v666, 8.507059e+37
    %v668 = vand.u32 %v656, 2147483648
    %v669 = vor.u32 1.1754944e-38, %v668
    %v670 = vsel %vm667, %v669, %v665
    %v671 = vmul.f32 1.0, %v670
    %v672 = vtanh.pop %v652
    %v673 = vmul.f32 %v671, %v615
    %675 = vrot.lane.b32.xlu0 %v672, 64
    %v676 = vpop.permute.xlu0 %675
    %v678 = vmul.f32 %v671, %v676
    %680 = vrot.lane.b32.xlu0 %v678, 32
    %v681 = vpop.permute.xlu0 %680
    %v683 = vadd.f32 %v673, %v681
    %v684 = vtanh.pop %v683
    %686 = vrot.lane.b32.xlu0 %v684, 64
    %v687 = vpop.permute.xlu0 %686
    %v689 = vmul.f32 %v671, %v687
    %691 = vrot.lane.b32.xlu0 %v689, 32
    %v692 = vpop.permute.xlu0 %691
    %s694 = scalar_lea.vmem [#allocation3], 48
    %695 = vst.msk [vmem:[%s694] sm:$0xff] %vm137, %v692
    %s696 = scalar_lea.vmem [#allocation2], 56
    %v697 = vld [vmem:[%s696] sm:$0xff]
    %v698 = vsel %vm137, %v692, 0
    %700 = vmatpush.msra.mxu0 0.0
    %701 = vmatpush.msra.mxu0 0.0
    %702 = vmatpush.msra.mxu0 0.0
    %703 = vmatpush.msra.mxu0 0.0
    %704 = vmatpush.msra.mxu0 0.0
    %705 = vmatpush.msra.mxu0 0.0
    %706 = vmatpush.msra.mxu0 0.0
    %707 = vmatpush.msra.mxu0 0.0
    %708 = vmatpush.msra.mxu0 0.0
    %709 = vmatpush.msra.mxu0 0.0
    %710 = vmatpush.msra.mxu0 0.0
    %711 = vmatpush.msra.mxu0 0.0
    %712 = vmatpush.msra.mxu0 %v214
    %713 = vmatpush.msra.mxu0 %v213
    %714 = vmatpush.msra.mxu0 %v212
    %715 = vmatpush.msra.mxu0 %v211
    %716 = vmatmul.f32.gmra.mxu0 %v698
    %v717 = vpop.f32.mrf.mxu0
    %v718 = vadd.f32 0.0, %v717
    %719 = vdwg.mxu0
    %v720 = vadd.f32 %v697, %v718
    %v721 = vxor.u32 %v720, 2147483648
    %v722 = vmul.f32 %v721, 1.442695
    %v723 = vpow.pop %v722
    %v724 = vadd.f32 %v723, 1.0
    %v725 = vrcp.pop %v724
    %v726 = vmul.f32 %v724, %v725
    %v727 = vsub.f32 1.0, %v726
    %v728 = vmul.f32 %v725, %v727
    %v729 = vadd.f32 %v725, %v728
    %vm730 = vweird.f32 %v724
    %vm731 = vweird.f32 %v725
    %vm732 = vmor %vm730, %vm731
    %v733 = vsel %vm732, %v725, %v729
    %v734 = vand.u32 2147483647, %v724
    %vm735 = vcmp.eq.f32.partialorder %v734, 8.507059e+37
    %v736 = vand.u32 %v724, 2147483648
    %v737 = vor.u32 1.1754944e-38, %v736
    %v738 = vsel %vm735, %v737, %v733
    %v739 = vmul.f32 1.0, %v738
    %v740 = vtanh.pop %v720
    %v741 = vmul.f32 %v739, %v683
    %743 = vrot.lane.b32.xlu0 %v740, 64
    %v744 = vpop.permute.xlu0 %743
    %v746 = vmul.f32 %v739, %v744
    %748 = vrot.lane.b32.xlu0 %v746, 32
    %v749 = vpop.permute.xlu0 %748
    %v751 = vadd.f32 %v741, %v749
    %v752 = vtanh.pop %v751
    %754 = vrot.lane.b32.xlu0 %v752, 64
    %v755 = vpop.permute.xlu0 %754
    %v757 = vmul.f32 %v739, %v755
    %759 = vrot.lane.b32.xlu0 %v757, 32
    %v760 = vpop.permute.xlu0 %759
    %s762 = scalar_lea.vmem [#allocation3], 56
    %763 = vst.msk [vmem:[%s762] sm:$0xff] %vm137, %v760
    %764 = vst.msk [vmem:[#allocation14] sm:$0xff] %vm137, %v760
    %766 = vrot.lane.b32.xlu0 %v751, 96
    %v767 = vpop.permute.xlu0 %766
    %769 = vst.msk [vmem:[#allocation16] sm:$0xff] %vm137, %v767
    %v770 = vld [vmem:[#allocation3] sm:$0xff]
    %v771 = vld [vmem:[#allocation3 + $0x8] sm:$0xff]
    %v772 = vld [vmem:[#allocation3 + $0x10] sm:$0xff]
    %v773 = vld [vmem:[#allocation3 + $0x18] sm:$0xff]
    %v774 = vld [vmem:[#allocation3 + $0x20] sm:$0xff]
    %v775 = vld [vmem:[#allocation3 + $0x28] sm:$0xff]
    %v776 = vld [vmem:[#allocation3 + $0x30] sm:$0xff]
    %v777 = vld [vmem:[#allocation3 + $0x38] sm:$0xff]
    %v778 = vld [vmem:[#allocation7] sm:$0xff]
    %v779 = vld [vmem:[#allocation7 + $0x8] sm:$0xff]
    %v780 = vld [vmem:[#allocation7 + $0x10] sm:$0xff]
    %v781 = vld [vmem:[#allocation7 + $0x18] sm:$0xff]
    %v782 = vld [vmem:[%s6] sm:$0x1]
    %v784 = vperm.slane %v782, 0
    %v787 = vsel %vm137, %v770, 0
    %v790 = vsel %vm137, %v771, 0
    %v793 = vsel %vm137, %v772, 0
    %v796 = vsel %vm137, %v773, 0
    %v799 = vsel %vm137, %v774, 0
    %v802 = vsel %vm137, %v775, 0
    %v805 = vsel %vm137, %v776, 0
    %v808 = vsel %vm137, %v777, 0
    %810 = vmatpush.msra.mxu0 0.0
    %811 = vmatpush.msra.mxu0 0.0
    %812 = vmatpush.msra.mxu0 0.0
    %813 = vmatpush.msra.mxu0 0.0
    %814 = vmatpush.msra.mxu0 0.0
    %815 = vmatpush.msra.mxu0 0.0
    %816 = vmatpush.msra.mxu0 0.0
    %817 = vmatpush.msra.mxu0 0.0
    %818 = vmatpush.msra.mxu0 0.0
    %819 = vmatpush.msra.mxu0 0.0
    %820 = vmatpush.msra.mxu0 0.0
    %821 = vmatpush.msra.mxu0 0.0
    %822 = vmatpush.msra.mxu0 %v781
    %823 = vmatpush.msra.mxu0 %v780
    %824 = vmatpush.msra.mxu0 %v779
    %825 = vmatpush.msra.mxu0 %v778
    %826 = vmatmul.f32.gmra.mxu0 %v787
    %v827 = vpop.f32.mrf.mxu0
    %v828 = vadd.f32 %v784, %v827
    %829 = vmatmul.f32.gmra.mxu0 %v790
    %v830 = vpop.f32.mrf.mxu0
    %v831 = vadd.f32 %v784, %v830
    %832 = vmatmul.f32.gmra.mxu0 %v793
    %v833 = vpop.f32.mrf.mxu0
    %v834 = vadd.f32 %v784, %v833
    %835 = vmatmul.f32.gmra.mxu0 %v796
    %v836 = vpop.f32.mrf.mxu0
    %v837 = vadd.f32 %v784, %v836
    %838 = vmatmul.f32.gmra.mxu0 %v799
    %v839 = vpop.f32.mrf.mxu0
    %v840 = vadd.f32 %v784, %v839
    %841 = vmatmul.f32.gmra.mxu0 %v802
    %v842 = vpop.f32.mrf.mxu0
    %v843 = vadd.f32 %v784, %v842
    %844 = vmatmul.f32.gmra.mxu0 %v805
    %v845 = vpop.f32.mrf.mxu0
    %v846 = vadd.f32 %v784, %v845
    %847 = vmatmul.f32.gmra.mxu0 %v808
    %v848 = vpop.f32.mrf.mxu0
    %v849 = vadd.f32 %v784, %v848
    %850 = vdwg.mxu0
    %851 = vst [vmem:[#allocation2] sm:$0xff] %v828
    %852 = vst [vmem:[#allocation2 + $0x8] sm:$0xff] %v831
    %853 = vst [vmem:[#allocation2 + $0x10] sm:$0xff] %v834
    %854 = vst [vmem:[#allocation2 + $0x18] sm:$0xff] %v837
    %855 = vst [vmem:[#allocation2 + $0x20] sm:$0xff] %v840
    %856 = vst [vmem:[#allocation2 + $0x28] sm:$0xff] %v843
    %857 = vst [vmem:[#allocation2 + $0x30] sm:$0xff] %v846
    %858 = vst [vmem:[#allocation2 + $0x38] sm:$0xff] %v849
    %v859 = vld [vmem:[#allocation9] sm:$0xff]
    %v860 = vld [vmem:[#allocation9 + $0x8] sm:$0xff]
    %v861 = vld [vmem:[#allocation9 + $0x10] sm:$0xff]
    %v862 = vld [vmem:[#allocation9 + $0x18] sm:$0xff]
    %s863 = scalar_lea.vmem [#allocation10], 8
    %v864 = vld [vmem:[%s863] sm:$0xff]
    %s865 = scalar_lea.vmem [#allocation12], 8
    %v866 = vld [vmem:[%s865] sm:$0xff]
    %v867 = vld [vmem:[#allocation2] sm:$0xff]
    %v869 = vsel %vm137, %v864, 0
    %871 = vmatpush.msra.mxu0 0.0
    %872 = vmatpush.msra.mxu0 0.0
    %873 = vmatpush.msra.mxu0 0.0
    %874 = vmatpush.msra.mxu0 0.0
    %875 = vmatpush.msra.mxu0 0.0
    %876 = vmatpush.msra.mxu0 0.0
    %877 = vmatpush.msra.mxu0 0.0
    %878 = vmatpush.msra.mxu0 0.0
    %879 = vmatpush.msra.mxu0 0.0
    %880 = vmatpush.msra.mxu0 0.0
    %881 = vmatpush.msra.mxu0 0.0
    %882 = vmatpush.msra.mxu0 0.0
    %883 = vmatpush.msra.mxu0 %v862
    %884 = vmatpush.msra.mxu0 %v861
    %885 = vmatpush.msra.mxu0 %v860
    %886 = vmatpush.msra.mxu0 %v859
    %887 = vmatmul.f32.gmra.mxu0 %v869
    %v888 = vpop.f32.mrf.mxu0
    %v889 = vadd.f32 0.0, %v888
    %890 = vdwg.mxu0
    %v891 = vadd.f32 %v867, %v889
    %v892 = vxor.u32 %v891, 2147483648
    %v893 = vmul.f32 %v892, 1.442695
    %v894 = vpow.pop %v893
    %v895 = vadd.f32 %v894, 1.0
    %v896 = vrcp.pop %v895
    %v897 = vmul.f32 %v895, %v896
    %v898 = vsub.f32 1.0, %v897
    %v899 = vmul.f32 %v896, %v898
    %v900 = vadd.f32 %v896, %v899
    %vm901 = vweird.f32 %v895
    %vm902 = vweird.f32 %v896
    %vm903 = vmor %vm901, %vm902
    %v904 = vsel %vm903, %v896, %v900
    %v905 = vand.u32 2147483647, %v895
    %vm906 = vcmp.eq.f32.partialorder %v905, 8.507059e+37
    %v907 = vand.u32 %v895, 2147483648
    %v908 = vor.u32 1.1754944e-38, %v907
    %v909 = vsel %vm906, %v908, %v904
    %v910 = vmul.f32 1.0, %v909
    %v911 = vtanh.pop %v891
    %913 = vrot.lane.b32.xlu0 %v866, 32
    %v914 = vpop.permute.xlu0 %913
    %v916 = vmul.f32 %v910, %v914
    %918 = vrot.lane.b32.xlu0 %v911, 64
    %v919 = vpop.permute.xlu0 %918
    %v921 = vmul.f32 %v910, %v919
    %923 = vrot.lane.b32.xlu0 %v921, 32
    %v924 = vpop.permute.xlu0 %923
    %v926 = vadd.f32 %v916, %v924
    %v927 = vtanh.pop %v926
    %929 = vrot.lane.b32.xlu0 %v927, 64
    %v930 = vpop.permute.xlu0 %929
    %v932 = vmul.f32 %v910, %v930
    %934 = vrot.lane.b32.xlu0 %v932, 32
    %v935 = vpop.permute.xlu0 %934
    %937 = vst.msk [vmem:[#allocation3] sm:$0xff] %vm137, %v935
    %v938 = vld [vmem:[%s288] sm:$0xff]
    %v939 = vsel %vm137, %v935, 0
    %941 = vmatpush.msra.mxu0 0.0
    %942 = vmatpush.msra.mxu0 0.0
    %943 = vmatpush.msra.mxu0 0.0
    %944 = vmatpush.msra.mxu0 0.0
    %945 = vmatpush.msra.mxu0 0.0
    %946 = vmatpush.msra.mxu0 0.0
    %947 = vmatpush.msra.mxu0 0.0
    %948 = vmatpush.msra.mxu0 0.0
    %949 = vmatpush.msra.mxu0 0.0
    %950 = vmatpush.msra.mxu0 0.0
    %951 = vmatpush.msra.mxu0 0.0
    %952 = vmatpush.msra.mxu0 0.0
    %953 = vmatpush.msra.mxu0 %v862
    %954 = vmatpush.msra.mxu0 %v861
    %955 = vmatpush.msra.mxu0 %v860
    %956 = vmatpush.msra.mxu0 %v859
    %957 = vmatmul.f32.gmra.mxu0 %v939
    %v958 = vpop.f32.mrf.mxu0
    %v959 = vadd.f32 0.0, %v958
    %960 = vdwg.mxu0
    %v961 = vadd.f32 %v938, %v959
    %v962 = vxor.u32 %v961, 2147483648
    %v963 = vmul.f32 %v962, 1.442695
    %v964 = vpow.pop %v963
    %v965 = vadd.f32 %v964, 1.0
    %v966 = vrcp.pop %v965
    %v967 = vmul.f32 %v965, %v966
    %v968 = vsub.f32 1.0, %v967
    %v969 = vmul.f32 %v966, %v968
    %v970 = vadd.f32 %v966, %v969
    %vm971 = vweird.f32 %v965
    %vm972 = vweird.f32 %v966
    %vm973 = vmor %vm971, %vm972
    %v974 = vsel %vm973, %v966, %v970
    %v975 = vand.u32 2147483647, %v965
    %vm976 = vcmp.eq.f32.partialorder %v975, 8.507059e+37
    %v977 = vand.u32 %v965, 2147483648
    %v978 = vor.u32 1.1754944e-38, %v977
    %v979 = vsel %vm976, %v978, %v974
    %v980 = vmul.f32 1.0, %v979
    %v981 = vtanh.pop %v961
    %v982 = vmul.f32 %v980, %v926
    %984 = vrot.lane.b32.xlu0 %v981, 64
    %v985 = vpop.permute.xlu0 %984
    %v987 = vmul.f32 %v980, %v985
    %989 = vrot.lane.b32.xlu0 %v987, 32
    %v990 = vpop.permute.xlu0 %989
    %v992 = vadd.f32 %v982, %v990
    %v993 = vtanh.pop %v992
    %995 = vrot.lane.b32.xlu0 %v993, 64
    %v996 = vpop.permute.xlu0 %995
    %v998 = vmul.f32 %v980, %v996
    %1000 = vrot.lane.b32.xlu0 %v998, 32
    %v1001 = vpop.permute.xlu0 %1000
    %1003 = vst.msk [vmem:[%s354] sm:$0xff] %vm137, %v1001
    %v1004 = vld [vmem:[%s356] sm:$0xff]
    %v1005 = vsel %vm137, %v1001, 0
    %1007 = vmatpush.msra.mxu0 0.0
    %1008 = vmatpush.msra.mxu0 0.0
    %1009 = vmatpush.msra.mxu0 0.0
    %1010 = vmatpush.msra.mxu0 0.0
    %1011 = vmatpush.msra.mxu0 0.0
    %1012 = vmatpush.msra.mxu0 0.0
    %1013 = vmatpush.msra.mxu0 0.0
    %1014 = vmatpush.msra.mxu0 0.0
    %1015 = vmatpush.msra.mxu0 0.0
    %1016 = vmatpush.msra.mxu0 0.0
    %1017 = vmatpush.msra.mxu0 0.0
    %1018 = vmatpush.msra.mxu0 0.0
    %1019 = vmatpush.msra.mxu0 %v862
    %1020 = vmatpush.msra.mxu0 %v861
    %1021 = vmatpush.msra.mxu0 %v860
    %1022 = vmatpush.msra.mxu0 %v859
    %1023 = vmatmul.f32.gmra.mxu0 %v1005
    %v1024 = vpop.f32.mrf.mxu0
    %v1025 = vadd.f32 0.0, %v1024
    %1026 = vdwg.mxu0
    %v1027 = vadd.f32 %v1004, %v1025
    %v1028 = vxor.u32 %v1027, 2147483648
    %v1029 = vmul.f32 %v1028, 1.442695
    %v1030 = vpow.pop %v1029
    %v1031 = vadd.f32 %v1030, 1.0
    %v1032 = vrcp.pop %v1031
    %v1033 = vmul.f32 %v1031, %v1032
    %v1034 = vsub.f32 1.0, %v1033
    %v1035 = vmul.f32 %v1032, %v1034
    %v1036 = vadd.f32 %v1032, %v1035
    %vm1037 = vweird.f32 %v1031
    %vm1038 = vweird.f32 %v1032
    %vm1039 = vmor %vm1037, %vm1038
    %v1040 = vsel %vm1039, %v1032, %v1036
    %v1041 = vand.u32 2147483647, %v1031
    %vm1042 = vcmp.eq.f32.partialorder %v1041, 8.507059e+37
    %v1043 = vand.u32 %v1031, 2147483648
    %v1044 = vor.u32 1.1754944e-38, %v1043
    %v1045 = vsel %vm1042, %v1044, %v1040
    %v1046 = vmul.f32 1.0, %v1045
    %v1047 = vtanh.pop %v1027
    %v1048 = vmul.f32 %v1046, %v992
    %1050 = vrot.lane.b32.xlu0 %v1047, 64
    %v1051 = vpop.permute.xlu0 %1050
    %v1053 = vmul.f32 %v1046, %v1051
    %1055 = vrot.lane.b32.xlu0 %v1053, 32
    %v1056 = vpop.permute.xlu0 %1055
    %v1058 = vadd.f32 %v1048, %v1056
    %v1059 = vtanh.pop %v1058
    %1061 = vrot.lane.b32.xlu0 %v1059, 64
    %v1062 = vpop.permute.xlu0 %1061
    %v1064 = vmul.f32 %v1046, %v1062
    %1066 = vrot.lane.b32.xlu0 %v1064, 32
    %v1067 = vpop.permute.xlu0 %1066
    %1069 = vst.msk [vmem:[%s422] sm:$0xff] %vm137, %v1067
    %v1070 = vld [vmem:[%s424] sm:$0xff]
    %v1071 = vsel %vm137, %v1067, 0
    %1073 = vmatpush.msra.mxu0 0.0
    %1074 = vmatpush.msra.mxu0 0.0
    %1075 = vmatpush.msra.mxu0 0.0
    %1076 = vmatpush.msra.mxu0 0.0
    %1077 = vmatpush.msra.mxu0 0.0
    %1078 = vmatpush.msra.mxu0 0.0
    %1079 = vmatpush.msra.mxu0 0.0
    %1080 = vmatpush.msra.mxu0 0.0
    %1081 = vmatpush.msra.mxu0 0.0
    %1082 = vmatpush.msra.mxu0 0.0
    %1083 = vmatpush.msra.mxu0 0.0
    %1084 = vmatpush.msra.mxu0 0.0
    %1085 = vmatpush.msra.mxu0 %v862
    %1086 = vmatpush.msra.mxu0 %v861
    %1087 = vmatpush.msra.mxu0 %v860
    %1088 = vmatpush.msra.mxu0 %v859
    %1089 = vmatmul.f32.gmra.mxu0 %v1071
    %v1090 = vpop.f32.mrf.mxu0
    %v1091 = vadd.f32 0.0, %v1090
    %1092 = vdwg.mxu0
    %v1093 = vadd.f32 %v1070, %v1091
    %v1094 = vxor.u32 %v1093, 2147483648
    %v1095 = vmul.f32 %v1094, 1.442695
    %v1096 = vpow.pop %v1095
    %v1097 = vadd.f32 %v1096, 1.0
    %v1098 = vrcp.pop %v1097
    %v1099 = vmul.f32 %v1097, %v1098
    %v1100 = vsub.f32 1.0, %v1099
    %v1101 = vmul.f32 %v1098, %v1100
    %v1102 = vadd.f32 %v1098, %v1101
    %vm1103 = vweird.f32 %v1097
    %vm1104 = vweird.f32 %v1098
    %vm1105 = vmor %vm1103, %vm1104
    %v1106 = vsel %vm1105, %v1098, %v1102
    %v1107 = vand.u32 2147483647, %v1097
    %vm1108 = vcmp.eq.f32.partialorder %v1107, 8.507059e+37
    %v1109 = vand.u32 %v1097, 2147483648
    %v1110 = vor.u32 1.1754944e-38, %v1109
    %v1111 = vsel %vm1108, %v1110, %v1106
    %v1112 = vmul.f32 1.0, %v1111
    %v1113 = vtanh.pop %v1093
    %v1114 = vmul.f32 %v1112, %v1058
    %1116 = vrot.lane.b32.xlu0 %v1113, 64
    %v1117 = vpop.permute.xlu0 %1116
    %v1119 = vmul.f32 %v1112, %v1117
    %1121 = vrot.lane.b32.xlu0 %v1119, 32
    %v1122 = vpop.permute.xlu0 %1121
    %v1124 = vadd.f32 %v1114, %v1122
    %v1125 = vtanh.pop %v1124
    %1127 = vrot.lane.b32.xlu0 %v1125, 64
    %v1128 = vpop.permute.xlu0 %1127
    %v1130 = vmul.f32 %v1112, %v1128
    %1132 = vrot.lane.b32.xlu0 %v1130, 32
    %v1133 = vpop.permute.xlu0 %1132
    %1135 = vst.msk [vmem:[%s490] sm:$0xff] %vm137, %v1133
    %v1136 = vld [vmem:[%s492] sm:$0xff]
    %v1137 = vsel %vm137, %v1133, 0
    %1139 = vmatpush.msra.mxu0 0.0
    %1140 = vmatpush.msra.mxu0 0.0
    %1141 = vmatpush.msra.mxu0 0.0
    %1142 = vmatpush.msra.mxu0 0.0
    %1143 = vmatpush.msra.mxu0 0.0
    %1144 = vmatpush.msra.mxu0 0.0
    %1145 = vmatpush.msra.mxu0 0.0
    %1146 = vmatpush.msra.mxu0 0.0
    %1147 = vmatpush.msra.mxu0 0.0
    %1148 = vmatpush.msra.mxu0 0.0
    %1149 = vmatpush.msra.mxu0 0.0
    %1150 = vmatpush.msra.mxu0 0.0
    %1151 = vmatpush.msra.mxu0 %v862
    %1152 = vmatpush.msra.mxu0 %v861
    %1153 = vmatpush.msra.mxu0 %v860
    %1154 = vmatpush.msra.mxu0 %v859
    %1155 = vmatmul.f32.gmra.mxu0 %v1137
    %v1156 = vpop.f32.mrf.mxu0
    %v1157 = vadd.f32 0.0, %v1156
    %1158 = vdwg.mxu0
    %v1159 = vadd.f32 %v1136, %v1157
    %v1160 = vxor.u32 %v1159, 2147483648
    %v1161 = vmul.f32 %v1160, 1.442695
    %v1162 = vpow.pop %v1161
    %v1163 = vadd.f32 %v1162, 1.0
    %v1164 = vrcp.pop %v1163
    %v1165 = vmul.f32 %v1163, %v1164
    %v1166 = vsub.f32 1.0, %v1165
    %v1167 = vmul.f32 %v1164, %v1166
    %v1168 = vadd.f32 %v1164, %v1167
    %vm1169 = vweird.f32 %v1163
    %vm1170 = vweird.f32 %v1164
    %vm1171 = vmor %vm1169, %vm1170
    %v1172 = vsel %vm1171, %v1164, %v1168
    %v1173 = vand.u32 2147483647, %v1163
    %vm1174 = vcmp.eq.f32.partialorder %v1173, 8.507059e+37
    %v1175 = vand.u32 %v1163, 2147483648
    %v1176 = vor.u32 1.1754944e-38, %v1175
    %v1177 = vsel %vm1174, %v1176, %v1172
    %v1178 = vmul.f32 1.0, %v1177
    %v1179 = vtanh.pop %v1159
    %v1180 = vmul.f32 %v1178, %v1124
    %1182 = vrot.lane.b32.xlu0 %v1179, 64
    %v1183 = vpop.permute.xlu0 %1182
    %v1185 = vmul.f32 %v1178, %v1183
    %1187 = vrot.lane.b32.xlu0 %v1185, 32
    %v1188 = vpop.permute.xlu0 %1187
    %v1190 = vadd.f32 %v1180, %v1188
    %v1191 = vtanh.pop %v1190
    %1193 = vrot.lane.b32.xlu0 %v1191, 64
    %v1194 = vpop.permute.xlu0 %1193
    %v1196 = vmul.f32 %v1178, %v1194
    %1198 = vrot.lane.b32.xlu0 %v1196, 32
    %v1199 = vpop.permute.xlu0 %1198
    %1201 = vst.msk [vmem:[%s558] sm:$0xff] %vm137, %v1199
    %v1202 = vld [vmem:[%s560] sm:$0xff]
    %v1203 = vsel %vm137, %v1199, 0
    %1205 = vmatpush.msra.mxu0 0.0
    %1206 = vmatpush.msra.mxu0 0.0
    %1207 = vmatpush.msra.mxu0 0.0
    %1208 = vmatpush.msra.mxu0 0.0
    %1209 = vmatpush.msra.mxu0 0.0
    %1210 = vmatpush.msra.mxu0 0.0
    %1211 = vmatpush.msra.mxu0 0.0
    %1212 = vmatpush.msra.mxu0 0.0
    %1213 = vmatpush.msra.mxu0 0.0
    %1214 = vmatpush.msra.mxu0 0.0
    %1215 = vmatpush.msra.mxu0 0.0
    %1216 = vmatpush.msra.mxu0 0.0
    %1217 = vmatpush.msra.mxu0 %v862
    %1218 = vmatpush.msra.mxu0 %v861
    %1219 = vmatpush.msra.mxu0 %v860
    %1220 = vmatpush.msra.mxu0 %v859
    %1221 = vmatmul.f32.gmra.mxu0 %v1203
    %v1222 = vpop.f32.mrf.mxu0
    %v1223 = vadd.f32 0.0, %v1222
    %1224 = vdwg.mxu0
    %v1225 = vadd.f32 %v1202, %v1223
    %v1226 = vxor.u32 %v1225, 2147483648
    %v1227 = vmul.f32 %v1226, 1.442695
    %v1228 = vpow.pop %v1227
    %v1229 = vadd.f32 %v1228, 1.0
    %v1230 = vrcp.pop %v1229
    %v1231 = vmul.f32 %v1229, %v1230
    %v1232 = vsub.f32 1.0, %v1231
    %v1233 = vmul.f32 %v1230, %v1232
    %v1234 = vadd.f32 %v1230, %v1233
    %vm1235 = vweird.f32 %v1229
    %vm1236 = vweird.f32 %v1230
    %vm1237 = vmor %vm1235, %vm1236
    %v1238 = vsel %vm1237, %v1230, %v1234
    %v1239 = vand.u32 2147483647, %v1229
    %vm1240 = vcmp.eq.f32.partialorder %v1239, 8.507059e+37
    %v1241 = vand.u32 %v1229, 2147483648
    %v1242 = vor.u32 1.1754944e-38, %v1241
    %v1243 = vsel %vm1240, %v1242, %v1238
    %v1244 = vmul.f32 1.0, %v1243
    %v1245 = vtanh.pop %v1225
    %v1246 = vmul.f32 %v1244, %v1190
    %1248 = vrot.lane.b32.xlu0 %v1245, 64
    %v1249 = vpop.permute.xlu0 %1248
    %v1251 = vmul.f32 %v1244, %v1249
    %1253 = vrot.lane.b32.xlu0 %v1251, 32
    %v1254 = vpop.permute.xlu0 %1253
    %v1256 = vadd.f32 %v1246, %v1254
    %v1257 = vtanh.pop %v1256
    %1259 = vrot.lane.b32.xlu0 %v1257, 64
    %v1260 = vpop.permute.xlu0 %1259
    %v1262 = vmul.f32 %v1244, %v1260
    %1264 = vrot.lane.b32.xlu0 %v1262, 32
    %v1265 = vpop.permute.xlu0 %1264
    %1267 = vst.msk [vmem:[%s626] sm:$0xff] %vm137, %v1265
    %v1268 = vld [vmem:[%s628] sm:$0xff]
    %v1269 = vsel %vm137, %v1265, 0
    %1271 = vmatpush.msra.mxu0 0.0
    %1272 = vmatpush.msra.mxu0 0.0
    %1273 = vmatpush.msra.mxu0 0.0
    %1274 = vmatpush.msra.mxu0 0.0
    %1275 = vmatpush.msra.mxu0 0.0
    %1276 = vmatpush.msra.mxu0 0.0
    %1277 = vmatpush.msra.mxu0 0.0
    %1278 = vmatpush.msra.mxu0 0.0
    %1279 = vmatpush.msra.mxu0 0.0
    %1280 = vmatpush.msra.mxu0 0.0
    %1281 = vmatpush.msra.mxu0 0.0
    %1282 = vmatpush.msra.mxu0 0.0
    %1283 = vmatpush.msra.mxu0 %v862
    %1284 = vmatpush.msra.mxu0 %v861
    %1285 = vmatpush.msra.mxu0 %v860
    %1286 = vmatpush.msra.mxu0 %v859
    %1287 = vmatmul.f32.gmra.mxu0 %v1269
    %v1288 = vpop.f32.mrf.mxu0
    %v1289 = vadd.f32 0.0, %v1288
    %1290 = vdwg.mxu0
    %v1291 = vadd.f32 %v1268, %v1289
    %v1292 = vxor.u32 %v1291, 2147483648
    %v1293 = vmul.f32 %v1292, 1.442695
    %v1294 = vpow.pop %v1293
    %v1295 = vadd.f32 %v1294, 1.0
    %v1296 = vrcp.pop %v1295
    %v1297 = vmul.f32 %v1295, %v1296
    %v1298 = vsub.f32 1.0, %v1297
    %v1299 = vmul.f32 %v1296, %v1298
    %v1300 = vadd.f32 %v1296, %v1299
    %vm1301 = vweird.f32 %v1295
    %vm1302 = vweird.f32 %v1296
    %vm1303 = vmor %vm1301, %vm1302
    %v1304 = vsel %vm1303, %v1296, %v1300
    %v1305 = vand.u32 2147483647, %v1295
    %vm1306 = vcmp.eq.f32.partialorder %v1305, 8.507059e+37
    %v1307 = vand.u32 %v1295, 2147483648
    %v1308 = vor.u32 1.1754944e-38, %v1307
    %v1309 = vsel %vm1306, %v1308, %v1304
    %v1310 = vmul.f32 1.0, %v1309
    %v1311 = vtanh.pop %v1291
    %v1312 = vmul.f32 %v1310, %v1256
    %1314 = vrot.lane.b32.xlu0 %v1311, 64
    %v1315 = vpop.permute.xlu0 %1314
    %v1317 = vmul.f32 %v1310, %v1315
    %1319 = vrot.lane.b32.xlu0 %v1317, 32
    %v1320 = vpop.permute.xlu0 %1319
    %v1322 = vadd.f32 %v1312, %v1320
    %v1323 = vtanh.pop %v1322
    %1325 = vrot.lane.b32.xlu0 %v1323, 64
    %v1326 = vpop.permute.xlu0 %1325
    %v1328 = vmul.f32 %v1310, %v1326
    %1330 = vrot.lane.b32.xlu0 %v1328, 32
    %v1331 = vpop.permute.xlu0 %1330
    %1333 = vst.msk [vmem:[%s694] sm:$0xff] %vm137, %v1331
    %v1334 = vld [vmem:[%s696] sm:$0xff]
    %v1335 = vsel %vm137, %v1331, 0
    %1337 = vmatpush.msra.mxu0 0.0
    %1338 = vmatpush.msra.mxu0 0.0
    %1339 = vmatpush.msra.mxu0 0.0
    %1340 = vmatpush.msra.mxu0 0.0
    %1341 = vmatpush.msra.mxu0 0.0
    %1342 = vmatpush.msra.mxu0 0.0
    %1343 = vmatpush.msra.mxu0 0.0
    %1344 = vmatpush.msra.mxu0 0.0
    %1345 = vmatpush.msra.mxu0 0.0
    %1346 = vmatpush.msra.mxu0 0.0
    %1347 = vmatpush.msra.mxu0 0.0
    %1348 = vmatpush.msra.mxu0 0.0
    %1349 = vmatpush.msra.mxu0 %v862
    %1350 = vmatpush.msra.mxu0 %v861
    %1351 = vmatpush.msra.mxu0 %v860
    %1352 = vmatpush.msra.mxu0 %v859
    %1353 = vmatmul.f32.gmra.mxu0 %v1335
    %v1354 = vpop.f32.mrf.mxu0
    %v1355 = vadd.f32 0.0, %v1354
    %1356 = vdwg.mxu0
    %v1357 = vadd.f32 %v1334, %v1355
    %v1358 = vxor.u32 %v1357, 2147483648
    %v1359 = vmul.f32 %v1358, 1.442695
    %v1360 = vpow.pop %v1359
    %v1361 = vadd.f32 %v1360, 1.0
    %v1362 = vrcp.pop %v1361
    %v1363 = vmul.f32 %v1361, %v1362
    %v1364 = vsub.f32 1.0, %v1363
    %v1365 = vmul.f32 %v1362, %v1364
    %v1366 = vadd.f32 %v1362, %v1365
    %vm1367 = vweird.f32 %v1361
    %vm1368 = vweird.f32 %v1362
    %vm1369 = vmor %vm1367, %vm1368
    %v1370 = vsel %vm1369, %v1362, %v1366
    %v1371 = vand.u32 2147483647, %v1361
    %vm1372 = vcmp.eq.f32.partialorder %v1371, 8.507059e+37
    %v1373 = vand.u32 %v1361, 2147483648
    %v1374 = vor.u32 1.1754944e-38, %v1373
    %v1375 = vsel %vm1372, %v1374, %v1370
    %v1376 = vmul.f32 1.0, %v1375
    %v1377 = vtanh.pop %v1357
    %v1378 = vmul.f32 %v1376, %v1322
    %1380 = vrot.lane.b32.xlu0 %v1377, 64
    %v1381 = vpop.permute.xlu0 %1380
    %v1383 = vmul.f32 %v1376, %v1381
    %1385 = vrot.lane.b32.xlu0 %v1383, 32
    %v1386 = vpop.permute.xlu0 %1385
    %v1388 = vadd.f32 %v1378, %v1386
    %v1389 = vtanh.pop %v1388
    %1391 = vrot.lane.b32.xlu0 %v1389, 64
    %v1392 = vpop.permute.xlu0 %1391
    %v1394 = vmul.f32 %v1376, %v1392
    %1396 = vrot.lane.b32.xlu0 %v1394, 32
    %v1397 = vpop.permute.xlu0 %1396
    %1399 = vst.msk [vmem:[%s762] sm:$0xff] %vm137, %v1397
    %s1400 = scalar_lea.vmem [#allocation14], 8
    %1401 = vst.msk [vmem:[%s1400] sm:$0xff] %vm137, %v1397
    %1403 = vrot.lane.b32.xlu0 %v1388, 96
    %v1404 = vpop.permute.xlu0 %1403
    %s1406 = scalar_lea.vmem [#allocation16], 8
    %1407 = vst.msk [vmem:[%s1406] sm:$0xff] %vm137, %v1404
    %v1408 = vld [vmem:[#allocation3] sm:$0xff]
    %v1409 = vld [vmem:[#allocation3 + $0x8] sm:$0xff]
    %v1410 = vld [vmem:[#allocation3 + $0x10] sm:$0xff]
    %v1411 = vld [vmem:[#allocation3 + $0x18] sm:$0xff]
    %v1412 = vld [vmem:[#allocation3 + $0x20] sm:$0xff]
    %v1413 = vld [vmem:[#allocation3 + $0x28] sm:$0xff]
    %v1414 = vld [vmem:[#allocation3 + $0x30] sm:$0xff]
    %v1415 = vld [vmem:[#allocation3 + $0x38] sm:$0xff]
    %v1416 = vld [vmem:[%s9] sm:$0xff]
    %v1417 = vld [vmem:[%s9 + $0x8] sm:$0xff]
    %v1418 = vld [vmem:[%s9 + $0x10] sm:$0xff]
    %v1419 = vld [vmem:[%s9 + $0x18] sm:$0xff]
    %v1420 = vld [vmem:[%s9 + $0x20] sm:$0xff]
    %v1421 = vld [vmem:[%s9 + $0x28] sm:$0xff]
    %v1422 = vld [vmem:[%s9 + $0x30] sm:$0xff]
    %v1423 = vld [vmem:[%s9 + $0x38] sm:$0xff]
    %v1424 = vld [vmem:[%s10] sm:$0x3]
    %v1426 = vperm.slane %v1424, 0
    %v1427 = vperm.slane %v1424, 1
    %v1431 = vsel %vm137, %v1408, 0
    %v1434 = vsel %vm137, %v1409, 0
    %v1437 = vsel %vm137, %v1410, 0
    %v1440 = vsel %vm137, %v1411, 0
    %v1443 = vsel %vm137, %v1412, 0
    %v1446 = vsel %vm137, %v1413, 0
    %v1449 = vsel %vm137, %v1414, 0
    %v1452 = vsel %vm137, %v1415, 0
    %1454 = vmatpush.msra.mxu0 0.0
    %1455 = vmatpush.msra.mxu0 0.0
    %1456 = vmatpush.msra.mxu0 0.0
    %1457 = vmatpush.msra.mxu0 0.0
    %1458 = vmatpush.msra.mxu0 0.0
    %1459 = vmatpush.msra.mxu0 0.0
    %1460 = vmatpush.msra.mxu0 0.0
    %1461 = vmatpush.msra.mxu0 0.0
    %1462 = vmatpush.msra.mxu0 0.0
    %1463 = vmatpush.msra.mxu0 0.0
    %1464 = vmatpush.msra.mxu0 0.0
    %1465 = vmatpush.msra.mxu0 0.0
    %1466 = vmatpush.msra.mxu0 %v1422
    %1467 = vmatpush.msra.mxu0 %v1420
    %1468 = vmatpush.msra.mxu0 %v1418
    %1469 = vmatpush.msra.mxu0 %v1416
    %1470 = vmatmul.f32.gmra.mxu0 %v1431
    %v1471 = vpop.f32.mrf.mxu0
    %v1472 = vadd.f32 %v1426, %v1471
    %1473 = vmatmul.f32.gmra.mxu0 %v1434
    %v1474 = vpop.f32.mrf.mxu0
    %v1475 = vadd.f32 %v1426, %v1474
    %1476 = vmatmul.f32.gmra.mxu0 %v1437
    %v1477 = vpop.f32.mrf.mxu0
    %v1478 = vadd.f32 %v1426, %v1477
    %1479 = vmatmul.f32.gmra.mxu0 %v1440
    %v1480 = vpop.f32.mrf.mxu0
    %v1481 = vadd.f32 %v1426, %v1480
    %1482 = vmatmul.f32.gmra.mxu0 %v1443
    %v1483 = vpop.f32.mrf.mxu0
    %v1484 = vadd.f32 %v1426, %v1483
    %1485 = vmatmul.f32.gmra.mxu0 %v1446
    %v1486 = vpop.f32.mrf.mxu0
    %v1487 = vadd.f32 %v1426, %v1486
    %1488 = vmatmul.f32.gmra.mxu0 %v1449
    %v1489 = vpop.f32.mrf.mxu0
    %v1490 = vadd.f32 %v1426, %v1489
    %1491 = vmatmul.f32.gmra.mxu0 %v1452
    %v1492 = vpop.f32.mrf.mxu0
    %v1493 = vadd.f32 %v1426, %v1492
    %1494 = vdwg.mxu0
    %1495 = vmatpush.msra.mxu0 0.0
    %1496 = vmatpush.msra.mxu0 0.0
    %1497 = vmatpush.msra.mxu0 0.0
    %1498 = vmatpush.msra.mxu0 0.0
    %1499 = vmatpush.msra.mxu0 0.0
    %1500 = vmatpush.msra.mxu0 0.0
    %1501 = vmatpush.msra.mxu0 0.0
    %1502 = vmatpush.msra.mxu0 0.0
    %1503 = vmatpush.msra.mxu0 0.0
    %1504 = vmatpush.msra.mxu0 0.0
    %1505 = vmatpush.msra.mxu0 0.0
    %1506 = vmatpush.msra.mxu0 0.0
    %1507 = vmatpush.msra.mxu0 %v1423
    %1508 = vmatpush.msra.mxu0 %v1421
    %1509 = vmatpush.msra.mxu0 %v1419
    %1510 = vmatpush.msra.mxu0 %v1417
    %1511 = vmatmul.f32.gmra.mxu0 %v1431
    %v1512 = vpop.f32.mrf.mxu0
    %v1513 = vadd.f32 %v1427, %v1512
    %1514 = vmatmul.f32.gmra.mxu0 %v1434
    %v1515 = vpop.f32.mrf.mxu0
    %v1516 = vadd.f32 %v1427, %v1515
    %1517 = vmatmul.f32.gmra.mxu0 %v1437
    %v1518 = vpop.f32.mrf.mxu0
    %v1519 = vadd.f32 %v1427, %v1518
    %1520 = vmatmul.f32.gmra.mxu0 %v1440
    %v1521 = vpop.f32.mrf.mxu0
    %v1522 = vadd.f32 %v1427, %v1521
    %1523 = vmatmul.f32.gmra.mxu0 %v1443
    %v1524 = vpop.f32.mrf.mxu0
    %v1525 = vadd.f32 %v1427, %v1524
    %1526 = vmatmul.f32.gmra.mxu0 %v1446
    %v1527 = vpop.f32.mrf.mxu0
    %v1528 = vadd.f32 %v1427, %v1527
    %1529 = vmatmul.f32.gmra.mxu0 %v1449
    %v1530 = vpop.f32.mrf.mxu0
    %v1531 = vadd.f32 %v1427, %v1530
    %1532 = vmatmul.f32.gmra.mxu0 %v1452
    %v1533 = vpop.f32.mrf.mxu0
    %v1534 = vadd.f32 %v1427, %v1533
    %1535 = vdwg.mxu0
    %1536 = vst [vmem:[#allocation13] sm:$0xff] %v1472
    %1537 = vst [vmem:[#allocation13 + $0x8] sm:$0xff] %v1513
    %1538 = vst [vmem:[#allocation13 + $0x10] sm:$0xff] %v1475
    %1539 = vst [vmem:[#allocation13 + $0x18] sm:$0xff] %v1516
    %1540 = vst [vmem:[#allocation13 + $0x20] sm:$0xff] %v1478
    %1541 = vst [vmem:[#allocation13 + $0x28] sm:$0xff] %v1519
    %1542 = vst [vmem:[#allocation13 + $0x30] sm:$0xff] %v1481
    %1543 = vst [vmem:[#allocation13 + $0x38] sm:$0xff] %v1522
    %1544 = vst [vmem:[#allocation13 + $0x40] sm:$0xff] %v1484
    %1545 = vst [vmem:[#allocation13 + $0x48] sm:$0xff] %v1525
    %1546 = vst [vmem:[#allocation13 + $0x50] sm:$0xff] %v1487
    %1547 = vst [vmem:[#allocation13 + $0x58] sm:$0xff] %v1528
    %1548 = vst [vmem:[#allocation13 + $0x60] sm:$0xff] %v1490
    %1549 = vst [vmem:[#allocation13 + $0x68] sm:$0xff] %v1531
    %1550 = vst [vmem:[#allocation13 + $0x70] sm:$0xff] %v1493
    %1551 = vst [vmem:[#allocation13 + $0x78] sm:$0xff] %v1534
    // Predicated region
    $region66: #{tpu_custom_call.1} parent=1 // pred_check
      _
    $region67: #{tpu_custom_call.1} parent=1 // pred_check_branch
      %1553 = sbr.rel (0) target = $region69
    $region68: #{tpu_custom_call.1} parent=1 // pred_region
      %1555 = vsyncadd [#allocation6], 0
      %s1556 = sshll.u32 [#allocation13], 4
      %s1557 = int_to_ptr.vmem [resolvable:$true] %s1556
      %s1558 = sshll.u32 %s11, 4
      %s1559 = int_to_ptr.hbm [resolvable:$true] %s1558
      %1564 = dma.vmem_to_hbm [thread:$0]  %s1557, 2048, %s1559, [#allocation6], 256, 256, 16
    $region69: #{tpu_custom_call.1} parent=1 // pred_fallthru
      _
    // Predicated region
    $region70: #{tpu_custom_call.1} parent=1 // pred_check
      _
    $region71: #{tpu_custom_call.1} parent=1 // pred_check_branch
      %1566 = sbr.rel (0) target = $region73
    $region72: #{tpu_custom_call.1} parent=1 // pred_region
      %1568 = vsyncadd [#allocation15], 0
      %s1569 = sshll.u32 [#allocation14], 4
      %s1570 = int_to_ptr.vmem [resolvable:$true] %s1569
      %s1571 = sshll.u32 %s12, 4
      %s1572 = int_to_ptr.hbm [resolvable:$true] %s1571
      %1577 = dma.vmem_to_hbm [thread:$0]  %s1570, 256, %s1572, [#allocation15], 128, 128, 8
    $region73: #{tpu_custom_call.1} parent=1 // pred_fallthru
      _
    // Predicated region
    $region74: #{tpu_custom_call.1} parent=1 // pred_check
      _
    $region75: #{tpu_custom_call.1} parent=1 // pred_check_branch
      %1579 = sbr.rel (0) target = $region77
    $region76: #{tpu_custom_call.1} parent=1 // pred_region
      %1581 = vsyncadd [#allocation15], 0
      %s1582 = sshll.u32 [#allocation16], 4
      %s1583 = int_to_ptr.vmem [resolvable:$true] %s1582
      %s1584 = sshll.u32 %s13, 4
      %s1585 = int_to_ptr.hbm [resolvable:$true] %s1584
      %1590 = dma.vmem_to_hbm [thread:$0]  %s1583, 256, %s1585, [#allocation15], 128, 128, 8
    $region77: #{tpu_custom_call.1} parent=1 // pred_fallthru
      _
    // Predicated region
    $region78: #{tpu_custom_call.1} parent=1 // pred_check
      _
    $region79: #{tpu_custom_call.1} parent=1 // pred_check_branch
      %1592 = sbr.rel (0) target = $region81
    $region80: #{tpu_custom_call.1} parent=1 // pred_region
      %1594 = dma.done [#allocation6], 2048
    $region81: #{tpu_custom_call.1} parent=1 // pred_fallthru
      _
    // Predicated region
    $region82: #{tpu_custom_call.1} parent=1 // pred_check
      _
    $region83: #{tpu_custom_call.1} parent=1 // pred_check_branch
      %1596 = sbr.rel (0) target = $region85
    $region84: #{tpu_custom_call.1} parent=1 // pred_region
      %1598 = dma.done [#allocation15], 256
    $region85: #{tpu_custom_call.1} parent=1 // pred_fallthru
      _
    // Predicated region
    $region86: #{tpu_custom_call.1} parent=1 // pred_check
      _
    $region87: #{tpu_custom_call.1} parent=1 // pred_check_branch
      %1600 = sbr.rel (0) target = $region89
    $region88: #{tpu_custom_call.1} parent=1 // pred_region
      %1602 = dma.done [#allocation15], 256
    $region89: #{tpu_custom_call.1} parent=1 // pred_fallthru
      _
    %1603 = vsyncpa [#allocation5], 1
    %1604 = vsyncpa [#allocation8], 1
    %1605 = vsyncpa [#allocation11], 1
    %1606 = vsyncpa [#allocation6], 1
    %1607 = vsyncpa [#allocation15], 1

</llo_original>
